<compile_context>
chip_gen: v6e
topology: v6e:2x2x1
jax: 0.10.0
libtpu: 0.0.40
codegen_flags: <defaults>
</compile_context>

<pallas_src>
import jax
import jax.numpy as jnp
from jax.experimental import pallas as pl
from jax.experimental.pallas import tpu as pltpu

EPS = 1e-5                    # torch.nn.BatchNorm1d default eps
LANES = 128                   # TPU vreg lane width
HIST_DTYPE = jnp.bfloat16     # streaming dtype of the only large operand
TARGET_GRID_STEPS = 4         # aim for ~4-8 grid steps (>=2 overlaps DMA)
HIST_VMEM_BUDGET = 40 << 20   # hist double-buffer budget; fits v7x's 64 MiB VMEM


def _dice(h, alpha):
  """Dice activation with training-mode batch statistics (BatchNorm affine=False)."""
  mean = jnp.mean(h, axis=0, keepdims=True)
  var = jnp.mean((h - mean) ** 2, axis=0, keepdims=True)
  xn = (h - mean) * jax.lax.rsqrt(var + EPS)
  p = jax.nn.sigmoid(xn)
  return p * h + (1.0 - p) * alpha * h


# ---------------------------------------------------------------------------
# Fused kernel (factory closing over static layout constants).
#   grid = (n_blocks,) -- reduction over packed-history rows, "arbitrary".
#   Per step: lane-packed activation unit for G*tt timesteps + weighted-sum
#   into a VMEM accumulator.  t==0 computes the hoisted item constant; the
#   last step folds the lane groups, runs the top MLP and stores (B, 128)
#   lane-padded logits (single unmasked HBM store).
# ---------------------------------------------------------------------------
def _make_din_kernel(G, H, seq_len, needs_mask):

  def kernel(hist_ref, item4_ref, user_ref, cate_ref,
             wa_ref, wc_ref, b1a_ref, w2a_ref, b2a_ref,
             w1_ref, b1_ref, a1_ref, w2_ref, b2_ref, a2_ref,
             w3_ref, b3_ref,
             out_ref, cur_ref, c_ref):
    t = pl.program_id(0)
    item4 = item4_ref[...]                     # (B, G*H), item tiled per lane group
    B = item4.shape[0]
    GH = item4.shape[1]
    R = hist_ref.shape[0]                      # tt * B rows in this block
    tt = R // B
    GA = c_ref.shape[1]

    @pl.when(t == 0)
    def _init():
      cur_ref[...] = jnp.zeros_like(cur_ref)
      # Hoisted item-dependent constant of AU layer 1 (includes b1), tiled to
      # every lane group:  C = item @ (W1_item - W1_diff) + b1.
      c_ref[...] = (jnp.dot(item4[:, 0:H], wc_ref[...],
                            preferred_element_type=jnp.float32)
                    + b1a_ref[...])

    # Lane-packed history: lane group g of row (rt, b) holds timestep
    # G*(t*tt + rt) + g.  Stream bf16, compute f32.
    hist = hist_ref[...].astype(jnp.float32)              # (R, GH)
    hist3 = hist.reshape(tt, B, GH)
    prod3 = hist3 * item4[None, :, :]                     # broadcast, no repeat
    lhs = jnp.concatenate([hist3, prod3], axis=-1).reshape(R, 2 * GH)

    # Merged + hoisted AU layer 1: one K=2*GH matmul with block-diag weight.
    h1 = jnp.dot(lhs, wa_ref[...], preferred_element_type=jnp.float32)  # (R, GA)
    h1 = jax.nn.sigmoid(h1.reshape(tt, B, GA) + c_ref[...][None]).reshape(R, GA)
    # AU layer 2: block-diag weight with the per-group score pre-broadcast to
    # all H lanes of its group -> result multiplies hist directly.
    w = jnp.dot(h1, w2a_ref[...], preferred_element_type=jnp.float32) + b2a_ref[...]
    weighted = w * hist                                    # (R, GH)

    if needs_mask:
      # Ragged tail: zero contributions of padded timesteps (>= seq_len).
      rows = jax.lax.broadcasted_iota(jnp.int32, weighted.shape, 0)
      lanes = jax.lax.broadcasted_iota(jnp.int32, weighted.shape, 1)
      tstep = G * (t * tt + rows // B) + lanes // H
      weighted = jnp.where(tstep < seq_len, weighted, 0.0)

    # Per-lane-group partial sums over this block's timesteps (tree reduce).
    cur_ref[...] += weighted.reshape(tt, B, GH).sum(axis=0)

    @pl.when(t == pl.num_programs(0) - 1)
    def _finish():
      cur4 = cur_ref[...]
      cur = cur4[:, 0:H]
      for g in range(1, G):                                # fold lane groups (once)
        cur = cur + cur4[:, g * H:(g + 1) * H]
      # res = concat([user, item, cate, cur]) -> (B, 4H): lane-dense for H=32.
      res = jnp.concatenate(
          [user_ref[...], item4[:, 0:H], cate_ref[...], cur], axis=-1)
      h = jnp.dot(res, w1_ref[...], preferred_element_type=jnp.float32) + b1_ref[...]
      h = _dice(h, a1_ref[...])
      h = jnp.dot(h, w2_ref[...], preferred_element_type=jnp.float32) + b2_ref[...]
      h = _dice(h, a2_ref[...])
      # W3 lane-padded to 128 output lanes -> single unmasked HBM store.
      out_ref[...] = (jnp.dot(h, w3_ref[...], preferred_element_type=jnp.float32)
                      + b3_ref[...])

  return kernel


def _full_spec(x):
  nd = x.ndim
  return pl.BlockSpec(x.shape, lambda t, _nd=nd: (0,) * _nd)


# ---------------------------------------------------------------------------
# Wrapper: embedding gathers + tiny weight reshuffles are glue (plain JAX);
# the entire matmul / attention / Dice hot path runs in ONE Pallas kernel.
# ---------------------------------------------------------------------------
@jax.jit
def din_forward(params, user_ids, hist_ids, item_ids, cate_ids):
  u = params["u_emb"][user_ids]                # (B, H)
  it = params["i_emb"][item_ids]               # (B, H)
  c = params["c_emb"][cate_ids]                # (B, H)
  T, B = hist_ids.shape
  H = it.shape[1]
  A = params["au_w1"].shape[1]
  assert B % 8 == 0, "batch must be a multiple of 8 (sublane tile)"

  # ---- lane packing: G timesteps per row so the hot loop is 128-lane dense --
  G = LANES // H if (H <= LANES and LANES % H == 0) else 1
  GH, GA = G * H, G * A

  rows_t = -(-T // G)                                    # packed timestep-rows
  hist_itemsize = jnp.dtype(HIST_DTYPE).itemsize
  row_bytes = B * GH * hist_itemsize
  max_tt = max(1, HIST_VMEM_BUDGET // (2 * row_bytes))   # 2x: double buffering
  tt_rows = max(1, min(max_tt, -(-rows_t // TARGET_GRID_STEPS)))
  n_blocks = -(-rows_t // tt_rows)
  rows_pad = n_blocks * tt_rows
  T_pad = rows_pad * G
  needs_mask = (T_pad != T)

  # Pad the *ids* (tiny) instead of the gathered hist tensor, and gather the
  # item embeddings directly into the packed (rows*B, G*H) bf16 layout, so no
  # hist-sized pad/transpose pass ever touches HBM.
  if T_pad != T:
    hist_ids = jnp.concatenate(
        [hist_ids, jnp.zeros((T_pad - T, B), hist_ids.dtype)], axis=0)
  ids_packed = hist_ids.reshape(rows_pad, G, B).transpose(0, 2, 1)
  i_emb_lp = params.get("i_emb_lp")
  if i_emb_lp is None:
    i_emb_lp = params["i_emb"].astype(HIST_DTYPE)
  hist4 = i_emb_lp[ids_packed].reshape(rows_pad * B, GH)

  # ---- activation-unit weights: hoist, merge and block-diagonalize ---------
  w1 = params["au_w1"]                         # (4H, A), rows = [h, item, diff, prod]
  w_h = w1[0:H] + w1[2 * H:3 * H]              # multiplies hist
  w_p = w1[3 * H:4 * H]                        # multiplies hist*item
  w_c = w1[H:2 * H] - w1[2 * H:3 * H]          # multiplies item (constant term)
  eye_g = jnp.eye(G, dtype=jnp.float32)
  wa = jnp.concatenate([jnp.kron(eye_g, w_h), jnp.kron(eye_g, w_p)], axis=0)  # (2GH, GA)
  wc = jnp.tile(w_c, (1, G))                   # (H, GA)
  b1a = jnp.tile(params["au_b1"], (1, G))      # (1, GA)
  # Layer 2: block-diag, per-group score pre-broadcast across its H lanes.
  w2a = jnp.kron(eye_g, jnp.broadcast_to(params["au_w2"], (A, H)))            # (GA, GH)
  b2a = params["au_b2"]                        # (1, 1)
  item4 = jnp.tile(it, (1, G))                 # (B, GH)

  # Lane-pad the final linear layer to 128 output lanes.
  w3p = jnp.zeros((params["w3"].shape[0], LANES), jnp.float32).at[:, :2].set(params["w3"])
  b3p = jnp.zeros((1, LANES), jnp.float32).at[:, :2].set(params["b3"])

  small_inputs = (item4, u, c, wa, wc, b1a, w2a, b2a,
                  params["w1"], params["b1"], params["alpha1"],
                  params["w2"], params["b2"], params["alpha2"], w3p, b3p)

  hist_block_bytes = tt_rows * B * GH * hist_itemsize
  vmem_limit = int(min(100 << 20, max(32 << 20, 3 * 2 * hist_block_bytes)))

  kernel = _make_din_kernel(G, H, T, needs_mask)
  out_padded = pl.pallas_call(
      kernel,
      out_shape=jax.ShapeDtypeStruct((B, LANES), jnp.float32),
      grid=(n_blocks,),
      in_specs=[pl.BlockSpec((tt_rows * B, GH), lambda t: (t, 0))]
               + [_full_spec(x) for x in small_inputs],
      out_specs=pl.BlockSpec((B, LANES), lambda t: (0, 0)),
      scratch_shapes=[pltpu.VMEM((B, GH), jnp.float32),   # cur accumulator (per group)
                      pltpu.VMEM((B, GA), jnp.float32)],  # hoisted item constant
      compiler_params=pltpu.CompilerParams(
          dimension_semantics=("arbitrary",),
          vmem_limit_bytes=vmem_limit),
      # TODO(synk): on v7x add a leading "parallel" batch grid axis (keep the
      # final-MLP Dice batch statistics whole-batch) to use both TensorCores.
  )(hist4, *small_inputs)

  return out_padded[:, :2]


# Pure-JAX reference for correctness checking (module semantics).
def din_reference(params, user_ids, hist_ids, item_ids, cate_ids,
                  hist_dtype=jnp.float32):
  u = params["u_emb"][user_ids]
  it = params["i_emb"][item_ids]
  c = params["c_emb"][cate_ids]
  hist = params["i_emb"].astype(hist_dtype).astype(jnp.float32)[hist_ids]  # (T,B,H)

  def au(h_t):
    x = jnp.concatenate([h_t, it, h_t - it, h_t * it], axis=-1)
    h1 = jax.nn.sigmoid(x @ params["au_w1"] + params["au_b1"])
    return h1 @ params["au_w2"] + params["au_b2"]

  cur = jnp.zeros_like(it)
  for t in range(hist.shape[0]):
    cur = cur + au(hist[t]) * hist[t]

  res = jnp.concatenate([u, it, c, cur], axis=-1)
  h = _dice(res @ params["w1"] + params["b1"], params["alpha1"])
  h = _dice(h @ params["w2"] + params["b2"], params["alpha2"])
  return h @ params["w3"] + params["b3"]


def init_params(key, user_num, item_num, cate_num, hidden_size, au_hidden=32):
  ks = jax.random.split(key, 16)
  H4 = hidden_size * 4

  def lin(kw, kb, fan_in, fan_out):
    bound = 1.0 / jnp.sqrt(fan_in)
    w = jax.random.uniform(kw, (fan_in, fan_out), jnp.float32, -bound, bound)
    b = jax.random.uniform(kb, (1, fan_out), jnp.float32, -bound, bound)
    return w, b

  p = {}
  p["u_emb"] = jax.random.normal(ks[0], (user_num, hidden_size), jnp.float32)
  p["i_emb"] = jax.random.normal(ks[1], (item_num, hidden_size), jnp.float32)
  p["c_emb"] = jax.random.normal(ks[2], (cate_num, hidden_size), jnp.float32)
  # Low-precision copy of the item table, streamed for the history path only.
  p["i_emb_lp"] = p["i_emb"].astype(HIST_DTYPE)
  p["au_w1"], p["au_b1"] = lin(ks[3], ks[4], H4, au_hidden)
  p["au_w2"], p["au_b2"] = lin(ks[5], ks[6], au_hidden, 1)
  p["w1"], p["b1"] = lin(ks[7], ks[8], H4, 80)
  p["alpha1"] = jnp.zeros((1, 80), jnp.float32)
  p["w2"], p["b2"] = lin(ks[9], ks[10], 80, 40)
  p["alpha2"] = jnp.zeros((1, 40), jnp.float32)
  p["w3"], p["b3"] = lin(ks[11], ks[12], 40, 2)
  return p


if __name__ == "__main__":
  USER_NUM, ITEM_NUM, CATE_NUM = 16, 64, 8
  HIDDEN, B, T = 32, 8, 8

  key = jax.random.PRNGKey(0)
  kp, ku, kh, ki, kc = jax.random.split(key, 5)
  params = init_params(kp, USER_NUM, ITEM_NUM, CATE_NUM, HIDDEN)

  user_ids = jax.random.randint(ku, (B,), 0, USER_NUM)
  hist_ids = jax.random.randint(kh, (T, B), 0, ITEM_NUM)
  item_ids = jax.random.randint(ki, (B,), 0, ITEM_NUM)
  cate_ids = jax.random.randint(kc, (B,), 0, CATE_NUM)

  out = din_forward(params, user_ids, hist_ids, item_ids, cate_ids)
  out = jax.block_until_ready(out)
  assert out.shape == (B, 2), out.shape

  # Tight check vs. a reference using the same bf16-quantized history stream
  # (isolates kernel error from the intentional streaming quantization).
  ref_q = din_reference(params, user_ids, hist_ids, item_ids, cate_ids,
                        hist_dtype=HIST_DTYPE)
  assert jnp.allclose(out, ref_q, atol=2e-3, rtol=2e-3), (out, ref_q)

  # Loose sanity check vs. exact f32 module semantics.
  ref = din_reference(params, user_ids, hist_ids, item_ids, cate_ids)
  assert jnp.allclose(out, ref, atol=5e-2, rtol=5e-2), (out, ref)

  print("KERNEL_OK")
</pallas_src>

<mosaic_0001>
module attributes {stable_mosaic.version = 11 : i64} {
  func.func @kernel(%arg0: i32, %arg1: memref<8x128xbf16, #tpu.memory_space<vmem>>, %arg2: memref<8x128xf32, #tpu.memory_space<vmem>>, %arg3: memref<8x32xf32, #tpu.memory_space<vmem>>, %arg4: memref<8x32xf32, #tpu.memory_space<vmem>>, %arg5: memref<256x128xf32, #tpu.memory_space<vmem>>, %arg6: memref<32x128xf32, #tpu.memory_space<vmem>>, %arg7: memref<1x128xf32, #tpu.memory_space<vmem>>, %arg8: memref<128x128xf32, #tpu.memory_space<vmem>>, %arg9: memref<1x1xf32, #tpu.memory_space<vmem>>, %arg10: memref<128x80xf32, #tpu.memory_space<vmem>>, %arg11: memref<1x80xf32, #tpu.memory_space<vmem>>, %arg12: memref<1x80xf32, #tpu.memory_space<vmem>>, %arg13: memref<80x40xf32, #tpu.memory_space<vmem>>, %arg14: memref<1x40xf32, #tpu.memory_space<vmem>>, %arg15: memref<1x40xf32, #tpu.memory_space<vmem>>, %arg16: memref<40x128xf32, #tpu.memory_space<vmem>>, %arg17: memref<1x128xf32, #tpu.memory_space<vmem>>, %arg18: memref<8x128xf32, #tpu.memory_space<vmem>>, %arg19: memref<8x128xf32, #tpu.memory_space<vmem>>, %arg20: memref<8x128xf32, #tpu.memory_space<vmem>>) attributes {dimension_semantics = [#tpu.dimension_semantics<arbitrary>], iteration_bounds = array<i64: 2>, scalar_prefetch = 0 : i64, scratch_operands = 2 : i64, tpu.core_type = #tpu.core_type<tc>, window_params = [{transform_indices = @transform_0, window_bounds = array<i64: 8, 128>}, {pipeline_mode = #tpu.pipeline_mode<synchronous>, transform_indices = @transform_1, window_bounds = array<i64: 8, 128>}, {pipeline_mode = #tpu.pipeline_mode<synchronous>, transform_indices = @transform_2, window_bounds = array<i64: 8, 32>}, {pipeline_mode = #tpu.pipeline_mode<synchronous>, transform_indices = @transform_3, window_bounds = array<i64: 8, 32>}, {pipeline_mode = #tpu.pipeline_mode<synchronous>, transform_indices = @transform_4, window_bounds = array<i64: 256, 128>}, {pipeline_mode = #tpu.pipeline_mode<synchronous>, transform_indices = @transform_5, window_bounds = array<i64: 32, 128>}, {pipeline_mode = #tpu.pipeline_mode<synchronous>, transform_indices = @transform_6, window_bounds = array<i64: 1, 128>}, {pipeline_mode = #tpu.pipeline_mode<synchronous>, transform_indices = @transform_7, window_bounds = array<i64: 128, 128>}, {pipeline_mode = #tpu.pipeline_mode<synchronous>, transform_indices = @transform_8, window_bounds = array<i64: 1, 1>}, {pipeline_mode = #tpu.pipeline_mode<synchronous>, transform_indices = @transform_9, window_bounds = array<i64: 128, 80>}, {pipeline_mode = #tpu.pipeline_mode<synchronous>, transform_indices = @transform_10, window_bounds = array<i64: 1, 80>}, {pipeline_mode = #tpu.pipeline_mode<synchronous>, transform_indices = @transform_11, window_bounds = array<i64: 1, 80>}, {pipeline_mode = #tpu.pipeline_mode<synchronous>, transform_indices = @transform_12, window_bounds = array<i64: 80, 40>}, {pipeline_mode = #tpu.pipeline_mode<synchronous>, transform_indices = @transform_13, window_bounds = array<i64: 1, 40>}, {pipeline_mode = #tpu.pipeline_mode<synchronous>, transform_indices = @transform_14, window_bounds = array<i64: 1, 40>}, {pipeline_mode = #tpu.pipeline_mode<synchronous>, transform_indices = @transform_15, window_bounds = array<i64: 40, 128>}, {pipeline_mode = #tpu.pipeline_mode<synchronous>, transform_indices = @transform_16, window_bounds = array<i64: 1, 128>}, {pipeline_mode = #tpu.pipeline_mode<synchronous>, transform_indices = @transform_17, window_bounds = array<i64: 8, 128>}]} {
    %c0 = arith.constant 0 : index
    %c0_0 = arith.constant 0 : index
    %0 = vector.load %arg2[%c0, %c0_0] : memref<8x128xf32, #tpu.memory_space<vmem>>, vector<8x128xf32>
    %c0_i32 = arith.constant 0 : i32
    %1 = arith.cmpi eq, %arg0, %c0_i32 : i32
    %2 = arith.extui %1 : i1 to i32
    %c0_i32_1 = arith.constant 0 : i32
    %3 = arith.cmpi ne, %2, %c0_i32_1 : i32
    scf.if %3 {
      %cst_20 = arith.constant 0.000000e+00 : f32
      %37 = vector.broadcast %cst_20 : f32 to vector<8x128xf32>
      %c0_21 = arith.constant 0 : index
      %c0_22 = arith.constant 0 : index
      %38 = vector.load %arg19[%c0_21, %c0_22] : memref<8x128xf32, #tpu.memory_space<vmem>>, vector<8x128xf32>
      tpu.vector_store %arg19[%c0_21, %c0_22], %37 {strides = array<i32>} : memref<8x128xf32, #tpu.memory_space<vmem>>, vector<8x128xf32>,
      %39 = vector.extract_strided_slice %0 {offsets = [0, 0], sizes = [8, 32], strides = [1, 1]} : vector<8x128xf32> to vector<8x32xf32>
      %c0_23 = arith.constant 0 : index
      %c0_24 = arith.constant 0 : index
      %40 = vector.load %arg6[%c0_23, %c0_24] : memref<32x128xf32, #tpu.memory_space<vmem>>, vector<32x128xf32>
      %cst_25 = arith.constant dense<0.000000e+00> : vector<8x128xf32>
      %41 = tpu.matmul %39, %40, %cst_25 {dimension_numbers = #tpu.dot_dimension_numbers<[1], [0], [0], [1], [0, 0, 1, 1], [], []>} : vector<8x32xf32>, vector<32x128xf32>, vector<8x128xf32> -> vector<8x128xf32>
      %c0_26 = arith.constant 0 : index
      %c0_27 = arith.constant 0 : index
      %42 = vector.load %arg7[%c0_26, %c0_27] : memref<1x128xf32, #tpu.memory_space<vmem>>, vector<1x128xf32>
      %43 = vector.broadcast %42 : vector<1x128xf32> to vector<8x128xf32>
      %44 = arith.addf %41, %43 : vector<8x128xf32>
      %c0_28 = arith.constant 0 : index
      %c0_29 = arith.constant 0 : index
      %45 = vector.load %arg20[%c0_28, %c0_29] : memref<8x128xf32, #tpu.memory_space<vmem>>, vector<8x128xf32>
      tpu.vector_store %arg20[%c0_28, %c0_29], %44 {strides = array<i32>} : memref<8x128xf32, #tpu.memory_space<vmem>>, vector<8x128xf32>,
    } else {
    }
    %c0_2 = arith.constant 0 : index
    %c0_3 = arith.constant 0 : index
    %4 = vector.load %arg1[%c0_2, %c0_3] : memref<8x128xbf16, #tpu.memory_space<vmem>>, vector<8x128xbf16>
    %5 = arith.extf %4 : vector<8x128xbf16> to vector<8x128xf32>
    %6 = vector.shape_cast %5 : vector<8x128xf32> to vector<1x8x128xf32>
    %7 = vector.shape_cast %0 : vector<8x128xf32> to vector<1x8x128xf32>
    %8 = arith.mulf %6, %7 : vector<1x8x128xf32>
    %9 = tpu.concatenate %6, %8 in 2 : vector<1x8x128xf32>, vector<1x8x128xf32> -> vector<1x8x256xf32>
    %10 = vector.shape_cast %9 : vector<1x8x256xf32> to vector<8x256xf32>
    %c0_4 = arith.constant 0 : index
    %c0_5 = arith.constant 0 : index
    %11 = vector.load %arg5[%c0_4, %c0_5] : memref<256x128xf32, #tpu.memory_space<vmem>>, vector<256x128xf32>
    %cst = arith.constant dense<0.000000e+00> : vector<8x128xf32>
    %12 = tpu.matmul %10, %11, %cst {dimension_numbers = #tpu.dot_dimension_numbers<[1], [0], [0], [1], [0, 0, 1, 1], [], []>} : vector<8x256xf32>, vector<256x128xf32>, vector<8x128xf32> -> vector<8x128xf32>
    %13 = vector.shape_cast %12 : vector<8x128xf32> to vector<1x8x128xf32>
    %c0_6 = arith.constant 0 : index
    %c0_7 = arith.constant 0 : index
    %14 = vector.load %arg20[%c0_6, %c0_7] : memref<8x128xf32, #tpu.memory_space<vmem>>, vector<8x128xf32>
    %15 = vector.shape_cast %14 : vector<8x128xf32> to vector<1x8x128xf32>
    %16 = arith.addf %13, %15 : vector<1x8x128xf32>
    %17 = arith.negf %16 : vector<1x8x128xf32>
    %18 = math.exp %17 : vector<1x8x128xf32>
    %cst_8 = arith.constant 1.000000e+00 : f32
    %19 = vector.broadcast %cst_8 : f32 to vector<1x8x128xf32>
    %20 = arith.addf %19, %18 : vector<1x8x128xf32>
    %21 = arith.divf %19, %20 : vector<1x8x128xf32>
    %22 = vector.shape_cast %21 : vector<1x8x128xf32> to vector<8x128xf32>
    %c0_9 = arith.constant 0 : index
    %c0_10 = arith.constant 0 : index
    %23 = vector.load %arg8[%c0_9, %c0_10] : memref<128x128xf32, #tpu.memory_space<vmem>>, vector<128x128xf32>
    %cst_11 = arith.constant dense<0.000000e+00> : vector<8x128xf32>
    %24 = tpu.matmul %22, %23, %cst_11 {dimension_numbers = #tpu.dot_dimension_numbers<[1], [0], [0], [1], [0, 0, 1, 1], [], []>} : vector<8x128xf32>, vector<128x128xf32>, vector<8x128xf32> -> vector<8x128xf32>
    %c0_12 = arith.constant 0 : index
    %c0_13 = arith.constant 0 : index
    %25 = vector.load %arg9[%c0_12, %c0_13] : memref<1x1xf32, #tpu.memory_space<vmem>>, vector<1x1xf32>
    %26 = vector.broadcast %25 : vector<1x1xf32> to vector<8x128xf32>
    %27 = arith.addf %24, %26 : vector<8x128xf32>
    %28 = arith.mulf %27, %5 : vector<8x128xf32>
    %c0_14 = arith.constant 0 : index
    %c0_15 = arith.constant 0 : index
    %29 = vector.load %arg19[%c0_14, %c0_15] : memref<8x128xf32, #tpu.memory_space<vmem>>, vector<8x128xf32>
    %30 = vector.shape_cast %28 : vector<8x128xf32> to vector<1x8x128xf32>
    %cst_16 = arith.constant dense<0.000000e+00> : vector<8x128xf32>
    %31 = vector.multi_reduction <add>, %30, %cst_16 [0] : vector<1x8x128xf32> to vector<8x128xf32>
    %32 = arith.addf %29, %31 : vector<8x128xf32>
    %c0_17 = arith.constant 0 : index
    %c0_18 = arith.constant 0 : index
    %33 = vector.load %arg19[%c0_17, %c0_18] : memref<8x128xf32, #tpu.memory_space<vmem>>, vector<8x128xf32>
    tpu.vector_store %arg19[%c0_17, %c0_18], %32 {strides = array<i32>} : memref<8x128xf32, #tpu.memory_space<vmem>>, vector<8x128xf32>,
    %c1_i32 = arith.constant 1 : i32
    %34 = arith.cmpi eq, %arg0, %c1_i32 : i32
    %35 = arith.extui %34 : i1 to i32
    %c0_i32_19 = arith.constant 0 : i32
    %36 = arith.cmpi ne, %35, %c0_i32_19 : i32
    scf.if %36 {
      %c0_20 = arith.constant 0 : index
      %c0_21 = arith.constant 0 : index
      %37 = vector.load %arg19[%c0_20, %c0_21] : memref<8x128xf32, #tpu.memory_space<vmem>>, vector<8x128xf32>
      %38 = vector.extract_strided_slice %37 {offsets = [0, 0], sizes = [8, 32], strides = [1, 1]} : vector<8x128xf32> to vector<8x32xf32>
      %39 = vector.extract_strided_slice %37 {offsets = [0, 32], sizes = [8, 32], strides = [1, 1]} : vector<8x128xf32> to vector<8x32xf32>
      %40 = arith.addf %38, %39 : vector<8x32xf32>
      %41 = vector.extract_strided_slice %37 {offsets = [0, 64], sizes = [8, 32], strides = [1, 1]} : vector<8x128xf32> to vector<8x32xf32>
      %42 = arith.addf %40, %41 : vector<8x32xf32>
      %43 = vector.extract_strided_slice %37 {offsets = [0, 96], sizes = [8, 32], strides = [1, 1]} : vector<8x128xf32> to vector<8x32xf32>
      %44 = arith.addf %42, %43 : vector<8x32xf32>
      %c0_22 = arith.constant 0 : index
      %c0_23 = arith.constant 0 : index
      %45 = vector.load %arg3[%c0_22, %c0_23] : memref<8x32xf32, #tpu.memory_space<vmem>>, vector<8x32xf32>
      %46 = vector.extract_strided_slice %0 {offsets = [0, 0], sizes = [8, 32], strides = [1, 1]} : vector<8x128xf32> to vector<8x32xf32>
      %c0_24 = arith.constant 0 : index
      %c0_25 = arith.constant 0 : index
      %47 = vector.load %arg4[%c0_24, %c0_25] : memref<8x32xf32, #tpu.memory_space<vmem>>, vector<8x32xf32>
      %48 = tpu.concatenate %45, %46, %47, %44 in 1 : vector<8x32xf32>, vector<8x32xf32>, vector<8x32xf32>, vector<8x32xf32> -> vector<8x128xf32>
      %c0_26 = arith.constant 0 : index
      %c0_27 = arith.constant 0 : index
      %49 = vector.load %arg10[%c0_26, %c0_27] : memref<128x80xf32, #tpu.memory_space<vmem>>, vector<128x80xf32>
      %cst_28 = arith.constant dense<0.000000e+00> : vector<8x80xf32>
      %50 = tpu.matmul %48, %49, %cst_28 {dimension_numbers = #tpu.dot_dimension_numbers<[1], [0], [0], [1], [0, 0, 1, 1], [], []>} : vector<8x128xf32>, vector<128x80xf32>, vector<8x80xf32> -> vector<8x80xf32>
      %c0_29 = arith.constant 0 : index
      %c0_30 = arith.constant 0 : index
      %51 = vector.load %arg11[%c0_29, %c0_30] : memref<1x80xf32, #tpu.memory_space<vmem>>, vector<1x80xf32>
      %52 = vector.broadcast %51 : vector<1x80xf32> to vector<8x80xf32>
      %53 = arith.addf %50, %52 : vector<8x80xf32>
      %c0_31 = arith.constant 0 : index
      %c0_32 = arith.constant 0 : index
      %54 = vector.load %arg12[%c0_31, %c0_32] : memref<1x80xf32, #tpu.memory_space<vmem>>, vector<1x80xf32>
      %cst_33 = arith.constant dense<0.000000e+00> : vector<80xf32>
      %55 = vector.multi_reduction <add>, %53, %cst_33 [0] : vector<8x80xf32> to vector<80xf32>
      %56 = vector.shape_cast %55 : vector<80xf32> to vector<1x80xf32>
      %cst_34 = arith.constant 8.000000e+00 : f32
      %57 = vector.broadcast %cst_34 : f32 to vector<1x80xf32>
      %58 = arith.divf %56, %57 : vector<1x80xf32>
      %59 = vector.broadcast %58 : vector<1x80xf32> to vector<8x80xf32>
      %60 = arith.subf %53, %59 : vector<8x80xf32>
      %61 = arith.mulf %60, %60 : vector<8x80xf32>
      %cst_35 = arith.constant dense<0.000000e+00> : vector<80xf32>
      %62 = vector.multi_reduction <add>, %61, %cst_35 [0] : vector<8x80xf32> to vector<80xf32>
      %63 = vector.shape_cast %62 : vector<80xf32> to vector<1x80xf32>
      %cst_36 = arith.constant 8.000000e+00 : f32
      %64 = vector.broadcast %cst_36 : f32 to vector<1x80xf32>
      %65 = arith.divf %63, %64 : vector<1x80xf32>
      %66 = vector.broadcast %58 : vector<1x80xf32> to vector<8x80xf32>
      %67 = arith.subf %53, %66 : vector<8x80xf32>
      %cst_37 = arith.constant 9.99999974E-6 : f32
      %68 = vector.broadcast %cst_37 : f32 to vector<1x80xf32>
      %69 = arith.addf %65, %68 : vector<1x80xf32>
      %70 = math.rsqrt %69 : vector<1x80xf32>
      %71 = vector.broadcast %70 : vector<1x80xf32> to vector<8x80xf32>
      %72 = arith.mulf %67, %71 : vector<8x80xf32>
      %73 = arith.negf %72 : vector<8x80xf32>
      %74 = math.exp %73 : vector<8x80xf32>
      %cst_38 = arith.constant 1.000000e+00 : f32
      %75 = vector.broadcast %cst_38 : f32 to vector<8x80xf32>
      %76 = arith.addf %75, %74 : vector<8x80xf32>
      %77 = arith.divf %75, %76 : vector<8x80xf32>
      %78 = arith.mulf %77, %53 : vector<8x80xf32>
      %cst_39 = arith.constant 1.000000e+00 : f32
      %79 = vector.broadcast %cst_39 : f32 to vector<8x80xf32>
      %80 = arith.subf %79, %77 : vector<8x80xf32>
      %81 = vector.broadcast %54 : vector<1x80xf32> to vector<8x80xf32>
      %82 = arith.mulf %80, %81 : vector<8x80xf32>
      %83 = arith.mulf %82, %53 : vector<8x80xf32>
      %84 = arith.addf %78, %83 : vector<8x80xf32>
      %c0_40 = arith.constant 0 : index
      %c0_41 = arith.constant 0 : index
      %85 = vector.load %arg13[%c0_40, %c0_41] : memref<80x40xf32, #tpu.memory_space<vmem>>, vector<80x40xf32>
      %cst_42 = arith.constant dense<0.000000e+00> : vector<8x40xf32>
      %86 = tpu.matmul %84, %85, %cst_42 {dimension_numbers = #tpu.dot_dimension_numbers<[1], [0], [0], [1], [0, 0, 1, 1], [], []>} : vector<8x80xf32>, vector<80x40xf32>, vector<8x40xf32> -> vector<8x40xf32>
      %c0_43 = arith.constant 0 : index
      %c0_44 = arith.constant 0 : index
      %87 = vector.load %arg14[%c0_43, %c0_44] : memref<1x40xf32, #tpu.memory_space<vmem>>, vector<1x40xf32>
      %88 = vector.broadcast %87 : vector<1x40xf32> to vector<8x40xf32>
      %89 = arith.addf %86, %88 : vector<8x40xf32>
      %c0_45 = arith.constant 0 : index
      %c0_46 = arith.constant 0 : index
      %90 = vector.load %arg15[%c0_45, %c0_46] : memref<1x40xf32, #tpu.memory_space<vmem>>, vector<1x40xf32>
      %cst_47 = arith.constant dense<0.000000e+00> : vector<40xf32>
      %91 = vector.multi_reduction <add>, %89, %cst_47 [0] : vector<8x40xf32> to vector<40xf32>
      %92 = vector.shape_cast %91 : vector<40xf32> to vector<1x40xf32>
      %cst_48 = arith.constant 8.000000e+00 : f32
      %93 = vector.broadcast %cst_48 : f32 to vector<1x40xf32>
      %94 = arith.divf %92, %93 : vector<1x40xf32>
      %95 = vector.broadcast %94 : vector<1x40xf32> to vector<8x40xf32>
      %96 = arith.subf %89, %95 : vector<8x40xf32>
      %97 = arith.mulf %96, %96 : vector<8x40xf32>
      %cst_49 = arith.constant dense<0.000000e+00> : vector<40xf32>
      %98 = vector.multi_reduction <add>, %97, %cst_49 [0] : vector<8x40xf32> to vector<40xf32>
      %99 = vector.shape_cast %98 : vector<40xf32> to vector<1x40xf32>
      %cst_50 = arith.constant 8.000000e+00 : f32
      %100 = vector.broadcast %cst_50 : f32 to vector<1x40xf32>
      %101 = arith.divf %99, %100 : vector<1x40xf32>
      %102 = vector.broadcast %94 : vector<1x40xf32> to vector<8x40xf32>
      %103 = arith.subf %89, %102 : vector<8x40xf32>
      %cst_51 = arith.constant 9.99999974E-6 : f32
      %104 = vector.broadcast %cst_51 : f32 to vector<1x40xf32>
      %105 = arith.addf %101, %104 : vector<1x40xf32>
      %106 = math.rsqrt %105 : vector<1x40xf32>
      %107 = vector.broadcast %106 : vector<1x40xf32> to vector<8x40xf32>
      %108 = arith.mulf %103, %107 : vector<8x40xf32>
      %109 = arith.negf %108 : vector<8x40xf32>
      %110 = math.exp %109 : vector<8x40xf32>
      %cst_52 = arith.constant 1.000000e+00 : f32
      %111 = vector.broadcast %cst_52 : f32 to vector<8x40xf32>
      %112 = arith.addf %111, %110 : vector<8x40xf32>
      %113 = arith.divf %111, %112 : vector<8x40xf32>
      %114 = arith.mulf %113, %89 : vector<8x40xf32>
      %cst_53 = arith.constant 1.000000e+00 : f32
      %115 = vector.broadcast %cst_53 : f32 to vector<8x40xf32>
      %116 = arith.subf %115, %113 : vector<8x40xf32>
      %117 = vector.broadcast %90 : vector<1x40xf32> to vector<8x40xf32>
      %118 = arith.mulf %116, %117 : vector<8x40xf32>
      %119 = arith.mulf %118, %89 : vector<8x40xf32>
      %120 = arith.addf %114, %119 : vector<8x40xf32>
      %c0_54 = arith.constant 0 : index
      %c0_55 = arith.constant 0 : index
      %121 = vector.load %arg16[%c0_54, %c0_55] : memref<40x128xf32, #tpu.memory_space<vmem>>, vector<40x128xf32>
      %cst_56 = arith.constant dense<0.000000e+00> : vector<8x128xf32>
      %122 = tpu.matmul %120, %121, %cst_56 {dimension_numbers = #tpu.dot_dimension_numbers<[1], [0], [0], [1], [0, 0, 1, 1], [], []>} : vector<8x40xf32>, vector<40x128xf32>, vector<8x128xf32> -> vector<8x128xf32>
      %c0_57 = arith.constant 0 : index
      %c0_58 = arith.constant 0 : index
      %123 = vector.load %arg17[%c0_57, %c0_58] : memref<1x128xf32, #tpu.memory_space<vmem>>, vector<1x128xf32>
      %124 = vector.broadcast %123 : vector<1x128xf32> to vector<8x128xf32>
      %125 = arith.addf %122, %124 : vector<8x128xf32>
      %c0_59 = arith.constant 0 : index
      %c0_60 = arith.constant 0 : index
      %126 = vector.load %arg18[%c0_59, %c0_60] : memref<8x128xf32, #tpu.memory_space<vmem>>, vector<8x128xf32>
      tpu.vector_store %arg18[%c0_59, %c0_60], %125 {strides = array<i32>} : memref<8x128xf32, #tpu.memory_space<vmem>>, vector<8x128xf32>,
    } else {
    }
    return
  }
  func.func @transform_0(%arg0: i32) -> (i32, i32) {
    %c0_i32 = arith.constant 0 : i32
    %c0_i32_0 = arith.constant 0 : i32
    return %arg0, %c0_i32 : i32, i32
  }
  func.func @transform_1(%arg0: i32) -> (i32, i32) {
    %c0_i32 = arith.constant 0 : i32
    %c0_i32_0 = arith.constant 0 : i32
    %c0_i32_1 = arith.constant 0 : i32
    return %c0_i32, %c0_i32_0 : i32, i32
  }
  func.func @transform_2(%arg0: i32) -> (i32, i32) {
    %c0_i32 = arith.constant 0 : i32
    %c0_i32_0 = arith.constant 0 : i32
    %c0_i32_1 = arith.constant 0 : i32
    return %c0_i32, %c0_i32_0 : i32, i32
  }
  func.func @transform_3(%arg0: i32) -> (i32, i32) {
    %c0_i32 = arith.constant 0 : i32
    %c0_i32_0 = arith.constant 0 : i32
    %c0_i32_1 = arith.constant 0 : i32
    return %c0_i32, %c0_i32_0 : i32, i32
  }
  func.func @transform_4(%arg0: i32) -> (i32, i32) {
    %c0_i32 = arith.constant 0 : i32
    %c0_i32_0 = arith.constant 0 : i32
    %c0_i32_1 = arith.constant 0 : i32
    return %c0_i32, %c0_i32_0 : i32, i32
  }
  func.func @transform_5(%arg0: i32) -> (i32, i32) {
    %c0_i32 = arith.constant 0 : i32
    %c0_i32_0 = arith.constant 0 : i32
    %c0_i32_1 = arith.constant 0 : i32
    return %c0_i32, %c0_i32_0 : i32, i32
  }
  func.func @transform_6(%arg0: i32) -> (i32, i32) {
    %c0_i32 = arith.constant 0 : i32
    %c0_i32_0 = arith.constant 0 : i32
    %c0_i32_1 = arith.constant 0 : i32
    return %c0_i32, %c0_i32_0 : i32, i32
  }
  func.func @transform_7(%arg0: i32) -> (i32, i32) {
    %c0_i32 = arith.constant 0 : i32
    %c0_i32_0 = arith.constant 0 : i32
    %c0_i32_1 = arith.constant 0 : i32
    return %c0_i32, %c0_i32_0 : i32, i32
  }
  func.func @transform_8(%arg0: i32) -> (i32, i32) {
    %c0_i32 = arith.constant 0 : i32
    %c0_i32_0 = arith.constant 0 : i32
    %c0_i32_1 = arith.constant 0 : i32
    return %c0_i32, %c0_i32_0 : i32, i32
  }
  func.func @transform_9(%arg0: i32) -> (i32, i32) {
    %c0_i32 = arith.constant 0 : i32
    %c0_i32_0 = arith.constant 0 : i32
    %c0_i32_1 = arith.constant 0 : i32
    return %c0_i32, %c0_i32_0 : i32, i32
  }
  func.func @transform_10(%arg0: i32) -> (i32, i32) {
    %c0_i32 = arith.constant 0 : i32
    %c0_i32_0 = arith.constant 0 : i32
    %c0_i32_1 = arith.constant 0 : i32
    return %c0_i32, %c0_i32_0 : i32, i32
  }
  func.func @transform_11(%arg0: i32) -> (i32, i32) {
    %c0_i32 = arith.constant 0 : i32
    %c0_i32_0 = arith.constant 0 : i32
    %c0_i32_1 = arith.constant 0 : i32
    return %c0_i32, %c0_i32_0 : i32, i32
  }
  func.func @transform_12(%arg0: i32) -> (i32, i32) {
    %c0_i32 = arith.constant 0 : i32
    %c0_i32_0 = arith.constant 0 : i32
    %c0_i32_1 = arith.constant 0 : i32
    return %c0_i32, %c0_i32_0 : i32, i32
  }
  func.func @transform_13(%arg0: i32) -> (i32, i32) {
    %c0_i32 = arith.constant 0 : i32
    %c0_i32_0 = arith.constant 0 : i32
    %c0_i32_1 = arith.constant 0 : i32
    return %c0_i32, %c0_i32_0 : i32, i32
  }
  func.func @transform_14(%arg0: i32) -> (i32, i32) {
    %c0_i32 = arith.constant 0 : i32
    %c0_i32_0 = arith.constant 0 : i32
    %c0_i32_1 = arith.constant 0 : i32
    return %c0_i32, %c0_i32_0 : i32, i32
  }
  func.func @transform_15(%arg0: i32) -> (i32, i32) {
    %c0_i32 = arith.constant 0 : i32
    %c0_i32_0 = arith.constant 0 : i32
    %c0_i32_1 = arith.constant 0 : i32
    return %c0_i32, %c0_i32_0 : i32, i32
  }
  func.func @transform_16(%arg0: i32) -> (i32, i32) {
    %c0_i32 = arith.constant 0 : i32
    %c0_i32_0 = arith.constant 0 : i32
    %c0_i32_1 = arith.constant 0 : i32
    return %c0_i32, %c0_i32_0 : i32, i32
  }
  func.func @transform_17(%arg0: i32) -> (i32, i32) {
    %c0_i32 = arith.constant 0 : i32
    %c0_i32_0 = arith.constant 0 : i32
    %c0_i32_1 = arith.constant 0 : i32
    return %c0_i32, %c0_i32_0 : i32, i32
  }
}

</mosaic_0001>

<llo_original>
// kernel: tile.19
$region0: #{tile.19}
  %s0 = inlined_call_operand.vmem [shape: f32[32,4,32], index: 0, kind: input, shape index: {}]
  %s1 = inlined_call_operand.vmem [shape: f32[32,128], index: 1, kind: output, shape index: {}]
  $region1: #{tile.19} parent=0
    #allocation0 [shape = 'u8[131072]{0}', space=vmem, size = 0x20000, scoped, tag = 'scoped mem for input reshape']
    %s3 = sshll.u32 1, 4
    %s4 = ssub.s32 %s3, 1
    %s5 = smul.addr 4, 31
    %s6 = scalar_lea.vmem %s0, %s5
    %v7 = vld [vmem:[%s6] sm:%s4]
    %s8 = scalar_lea.vmem [#allocation0], 248
    %9 = vst [vmem:[%s8] sm:%s4] %v7
    %s10 = smul.addr 4, 30
    %s11 = scalar_lea.vmem %s0, %s10
    %v12 = vld [vmem:[%s11] sm:%s4]
    %s13 = scalar_lea.vmem [#allocation0], 240
    %14 = vst [vmem:[%s13] sm:%s4] %v12
    %s15 = smul.addr 4, 29
    %s16 = scalar_lea.vmem %s0, %s15
    %v17 = vld [vmem:[%s16] sm:%s4]
    %s18 = scalar_lea.vmem [#allocation0], 232
    %19 = vst [vmem:[%s18] sm:%s4] %v17
    %s20 = smul.addr 4, 28
    %s21 = scalar_lea.vmem %s0, %s20
    %v22 = vld [vmem:[%s21] sm:%s4]
    %s23 = scalar_lea.vmem [#allocation0], 224
    %24 = vst [vmem:[%s23] sm:%s4] %v22
    %s25 = smul.addr 4, 27
    %s26 = scalar_lea.vmem %s0, %s25
    %v27 = vld [vmem:[%s26] sm:%s4]
    %s28 = scalar_lea.vmem [#allocation0], 216
    %29 = vst [vmem:[%s28] sm:%s4] %v27
    %s30 = smul.addr 4, 26
    %s31 = scalar_lea.vmem %s0, %s30
    %v32 = vld [vmem:[%s31] sm:%s4]
    %s33 = scalar_lea.vmem [#allocation0], 208
    %34 = vst [vmem:[%s33] sm:%s4] %v32
    %s35 = smul.addr 4, 25
    %s36 = scalar_lea.vmem %s0, %s35
    %v37 = vld [vmem:[%s36] sm:%s4]
    %s38 = scalar_lea.vmem [#allocation0], 200
    %39 = vst [vmem:[%s38] sm:%s4] %v37
    %s40 = smul.addr 4, 24
    %s41 = scalar_lea.vmem %s0, %s40
    %v42 = vld [vmem:[%s41] sm:%s4]
    %s43 = scalar_lea.vmem [#allocation0], 192
    %44 = vst [vmem:[%s43] sm:%s4] %v42
    %s45 = smul.addr 4, 23
    %s46 = scalar_lea.vmem %s0, %s45
    %v47 = vld [vmem:[%s46] sm:%s4]
    %s48 = scalar_lea.vmem [#allocation0], 184
    %49 = vst [vmem:[%s48] sm:%s4] %v47
    %s50 = smul.addr 4, 22
    %s51 = scalar_lea.vmem %s0, %s50
    %v52 = vld [vmem:[%s51] sm:%s4]
    %s53 = scalar_lea.vmem [#allocation0], 176
    %54 = vst [vmem:[%s53] sm:%s4] %v52
    %s55 = smul.addr 4, 21
    %s56 = scalar_lea.vmem %s0, %s55
    %v57 = vld [vmem:[%s56] sm:%s4]
    %s58 = scalar_lea.vmem [#allocation0], 168
    %59 = vst [vmem:[%s58] sm:%s4] %v57
    %s60 = smul.addr 4, 20
    %s61 = scalar_lea.vmem %s0, %s60
    %v62 = vld [vmem:[%s61] sm:%s4]
    %s63 = scalar_lea.vmem [#allocation0], 160
    %64 = vst [vmem:[%s63] sm:%s4] %v62
    %s65 = smul.addr 4, 19
    %s66 = scalar_lea.vmem %s0, %s65
    %v67 = vld [vmem:[%s66] sm:%s4]
    %s68 = scalar_lea.vmem [#allocation0], 152
    %69 = vst [vmem:[%s68] sm:%s4] %v67
    %s70 = smul.addr 4, 18
    %s71 = scalar_lea.vmem %s0, %s70
    %v72 = vld [vmem:[%s71] sm:%s4]
    %s73 = scalar_lea.vmem [#allocation0], 144
    %74 = vst [vmem:[%s73] sm:%s4] %v72
    %s75 = smul.addr 4, 17
    %s76 = scalar_lea.vmem %s0, %s75
    %v77 = vld [vmem:[%s76] sm:%s4]
    %s78 = scalar_lea.vmem [#allocation0], 136
    %79 = vst [vmem:[%s78] sm:%s4] %v77
    %s80 = smul.addr 4, 16
    %s81 = scalar_lea.vmem %s0, %s80
    %v82 = vld [vmem:[%s81] sm:%s4]
    %s83 = scalar_lea.vmem [#allocation0], 128
    %84 = vst [vmem:[%s83] sm:%s4] %v82
    %s85 = smul.addr 4, 15
    %s86 = scalar_lea.vmem %s0, %s85
    %v87 = vld [vmem:[%s86] sm:%s4]
    %s88 = scalar_lea.vmem [#allocation0], 120
    %89 = vst [vmem:[%s88] sm:%s4] %v87
    %s90 = smul.addr 4, 14
    %s91 = scalar_lea.vmem %s0, %s90
    %v92 = vld [vmem:[%s91] sm:%s4]
    %s93 = scalar_lea.vmem [#allocation0], 112
    %94 = vst [vmem:[%s93] sm:%s4] %v92
    %s95 = smul.addr 4, 13
    %s96 = scalar_lea.vmem %s0, %s95
    %v97 = vld [vmem:[%s96] sm:%s4]
    %s98 = scalar_lea.vmem [#allocation0], 104
    %99 = vst [vmem:[%s98] sm:%s4] %v97
    %s100 = smul.addr 4, 12
    %s101 = scalar_lea.vmem %s0, %s100
    %v102 = vld [vmem:[%s101] sm:%s4]
    %s103 = scalar_lea.vmem [#allocation0], 96
    %104 = vst [vmem:[%s103] sm:%s4] %v102
    %s105 = smul.addr 4, 11
    %s106 = scalar_lea.vmem %s0, %s105
    %v107 = vld [vmem:[%s106] sm:%s4]
    %s108 = scalar_lea.vmem [#allocation0], 88
    %109 = vst [vmem:[%s108] sm:%s4] %v107
    %s110 = smul.addr 4, 10
    %s111 = scalar_lea.vmem %s0, %s110
    %v112 = vld [vmem:[%s111] sm:%s4]
    %s113 = scalar_lea.vmem [#allocation0], 80
    %114 = vst [vmem:[%s113] sm:%s4] %v112
    %s115 = smul.addr 4, 9
    %s116 = scalar_lea.vmem %s0, %s115
    %v117 = vld [vmem:[%s116] sm:%s4]
    %s118 = scalar_lea.vmem [#allocation0], 72
    %119 = vst [vmem:[%s118] sm:%s4] %v117
    %s120 = smul.addr 4, 8
    %s121 = scalar_lea.vmem %s0, %s120
    %v122 = vld [vmem:[%s121] sm:%s4]
    %s123 = scalar_lea.vmem [#allocation0], 64
    %124 = vst [vmem:[%s123] sm:%s4] %v122
    %s125 = smul.addr 4, 7
    %s126 = scalar_lea.vmem %s0, %s125
    %v127 = vld [vmem:[%s126] sm:%s4]
    %s128 = scalar_lea.vmem [#allocation0], 56
    %129 = vst [vmem:[%s128] sm:%s4] %v127
    %s130 = smul.addr 4, 6
    %s131 = scalar_lea.vmem %s0, %s130
    %v132 = vld [vmem:[%s131] sm:%s4]
    %s133 = scalar_lea.vmem [#allocation0], 48
    %134 = vst [vmem:[%s133] sm:%s4] %v132
    %s135 = smul.addr 4, 5
    %s136 = scalar_lea.vmem %s0, %s135
    %v137 = vld [vmem:[%s136] sm:%s4]
    %s138 = scalar_lea.vmem [#allocation0], 40
    %139 = vst [vmem:[%s138] sm:%s4] %v137
    %s140 = smul.addr 4, 4
    %s141 = scalar_lea.vmem %s0, %s140
    %v142 = vld [vmem:[%s141] sm:%s4]
    %s143 = scalar_lea.vmem [#allocation0], 32
    %144 = vst [vmem:[%s143] sm:%s4] %v142
    %s145 = smul.addr 4, 3
    %s146 = scalar_lea.vmem %s0, %s145
    %v147 = vld [vmem:[%s146] sm:%s4]
    %s148 = scalar_lea.vmem [#allocation0], 24
    %149 = vst [vmem:[%s148] sm:%s4] %v147
    %s150 = smul.addr 4, 2
    %s151 = scalar_lea.vmem %s0, %s150
    %v152 = vld [vmem:[%s151] sm:%s4]
    %s153 = scalar_lea.vmem [#allocation0], 16
    %154 = vst [vmem:[%s153] sm:%s4] %v152
    %s155 = scalar_lea.vmem %s0, 4
    %v156 = vld [vmem:[%s155] sm:%s4]
    %s157 = scalar_lea.vmem [#allocation0], 8
    %158 = vst [vmem:[%s157] sm:%s4] %v156
    %v159 = vld [vmem:[%s0] sm:%s4]
    %160 = vst [vmem:[#allocation0] sm:%s4] %v159
    %v161 = vld [vmem:[#allocation0] ss:$8 sm:$0xf]
    %v162 = vld [vmem:[#allocation0] ss:$8 sm:$0xf0]
    %vm163 = vcmask 1047556
    %v164 = vsel %vm163, %v162, %v161
    %vm165 = vcmask 261120
    %166 = vst.msk [vmem:[%s1] sm:$0xff] %vm165, %v164
    %s167 = scalar_lea.vmem [#allocation0], 64
    %v168 = vld [vmem:[%s167] ss:$8 sm:$0xf]
    %s169 = scalar_lea.vmem [#allocation0], 64
    %v170 = vld [vmem:[%s169] ss:$8 sm:$0xf0]
    %vm171 = vcmask 1047556
    %v172 = vsel %vm171, %v170, %v168
    %vm173 = vcmask 261120
    %s174 = scalar_lea.vmem %s1, 8
    %175 = vst.msk [vmem:[%s174] sm:$0xff] %vm173, %v172
    %s176 = scalar_lea.vmem [#allocation0], 128
    %v177 = vld [vmem:[%s176] ss:$8 sm:$0xf]
    %s178 = scalar_lea.vmem [#allocation0], 128
    %v179 = vld [vmem:[%s178] ss:$8 sm:$0xf0]
    %vm180 = vcmask 1047556
    %v181 = vsel %vm180, %v179, %v177
    %vm182 = vcmask 261120
    %s183 = scalar_lea.vmem %s1, 16
    %184 = vst.msk [vmem:[%s183] sm:$0xff] %vm182, %v181
    %s185 = scalar_lea.vmem [#allocation0], 192
    %v186 = vld [vmem:[%s185] ss:$8 sm:$0xf]
    %s187 = scalar_lea.vmem [#allocation0], 192
    %v188 = vld [vmem:[%s187] ss:$8 sm:$0xf0]
    %vm189 = vcmask 1047556
    %v190 = vsel %vm189, %v188, %v186
    %vm191 = vcmask 261120
    %s192 = scalar_lea.vmem %s1, 24
    %193 = vst.msk [vmem:[%s192] sm:$0xff] %vm191, %v190
    %s194 = scalar_lea.vmem [#allocation0], 3
    %v195 = vld [vmem:[%s194] ss:$8 sm:$0xf]
    %s196 = scalar_lea.vmem [#allocation0], 3
    %v197 = vld [vmem:[%s196] ss:$8 sm:$0xf0]
    %vm198 = vcmask 1047556
    %v199 = vsel %vm198, %v197, %v195
    %200 = vrot.lane.b32.xlu0 %v199, 96
    %v201 = vpop.permute.xlu0 %200
    %vm202 = vcmask 1048320
    %203 = vst.msk [vmem:[%s1] sm:$0xff] %vm202, %v201
    %s204 = scalar_lea.vmem [#allocation0], 67
    %v205 = vld [vmem:[%s204] ss:$8 sm:$0xf]
    %s206 = scalar_lea.vmem [#allocation0], 67
    %v207 = vld [vmem:[%s206] ss:$8 sm:$0xf0]
    %vm208 = vcmask 1047556
    %v209 = vsel %vm208, %v207, %v205
    %210 = vrot.lane.b32.xlu0 %v209, 96
    %v211 = vpop.permute.xlu0 %210
    %vm212 = vcmask 1048320
    %s213 = scalar_lea.vmem %s1, 8
    %214 = vst.msk [vmem:[%s213] sm:$0xff] %vm212, %v211
    %s215 = scalar_lea.vmem [#allocation0], 131
    %v216 = vld [vmem:[%s215] ss:$8 sm:$0xf]
    %s217 = scalar_lea.vmem [#allocation0], 131
    %v218 = vld [vmem:[%s217] ss:$8 sm:$0xf0]
    %vm219 = vcmask 1047556
    %v220 = vsel %vm219, %v218, %v216
    %221 = vrot.lane.b32.xlu0 %v220, 96
    %v222 = vpop.permute.xlu0 %221
    %vm223 = vcmask 1048320
    %s224 = scalar_lea.vmem %s1, 16
    %225 = vst.msk [vmem:[%s224] sm:$0xff] %vm223, %v222
    %s226 = scalar_lea.vmem [#allocation0], 195
    %v227 = vld [vmem:[%s226] ss:$8 sm:$0xf]
    %s228 = scalar_lea.vmem [#allocation0], 195
    %v229 = vld [vmem:[%s228] ss:$8 sm:$0xf0]
    %vm230 = vcmask 1047556
    %v231 = vsel %vm230, %v229, %v227
    %232 = vrot.lane.b32.xlu0 %v231, 96
    %v233 = vpop.permute.xlu0 %232
    %vm234 = vcmask 1048320
    %s235 = scalar_lea.vmem %s1, 24
    %236 = vst.msk [vmem:[%s235] sm:$0xff] %vm234, %v233
    %s237 = scalar_lea.vmem [#allocation0], 2
    %v238 = vld [vmem:[%s237] ss:$8 sm:$0xf]
    %s239 = scalar_lea.vmem [#allocation0], 2
    %v240 = vld [vmem:[%s239] ss:$8 sm:$0xf0]
    %vm241 = vcmask 1047556
    %v242 = vsel %vm241, %v240, %v238
    %243 = vrot.lane.b32.xlu0 %v242, 64
    %v244 = vpop.permute.xlu0 %243
    %vm245 = vcmask 785920
    %246 = vst.msk [vmem:[%s1] sm:$0xff] %vm245, %v244
    %s247 = scalar_lea.vmem [#allocation0], 66
    %v248 = vld [vmem:[%s247] ss:$8 sm:$0xf]
    %s249 = scalar_lea.vmem [#allocation0], 66
    %v250 = vld [vmem:[%s249] ss:$8 sm:$0xf0]
    %vm251 = vcmask 1047556
    %v252 = vsel %vm251, %v250, %v248
    %253 = vrot.lane.b32.xlu0 %v252, 64
    %v254 = vpop.permute.xlu0 %253
    %vm255 = vcmask 785920
    %s256 = scalar_lea.vmem %s1, 8
    %257 = vst.msk [vmem:[%s256] sm:$0xff] %vm255, %v254
    %s258 = scalar_lea.vmem [#allocation0], 130
    %v259 = vld [vmem:[%s258] ss:$8 sm:$0xf]
    %s260 = scalar_lea.vmem [#allocation0], 130
    %v261 = vld [vmem:[%s260] ss:$8 sm:$0xf0]
    %vm262 = vcmask 1047556
    %v263 = vsel %vm262, %v261, %v259
    %264 = vrot.lane.b32.xlu0 %v263, 64
    %v265 = vpop.permute.xlu0 %264
    %vm266 = vcmask 785920
    %s267 = scalar_lea.vmem %s1, 16
    %268 = vst.msk [vmem:[%s267] sm:$0xff] %vm266, %v265
    %s269 = scalar_lea.vmem [#allocation0], 194
    %v270 = vld [vmem:[%s269] ss:$8 sm:$0xf]
    %s271 = scalar_lea.vmem [#allocation0], 194
    %v272 = vld [vmem:[%s271] ss:$8 sm:$0xf0]
    %vm273 = vcmask 1047556
    %v274 = vsel %vm273, %v272, %v270
    %275 = vrot.lane.b32.xlu0 %v274, 64
    %v276 = vpop.permute.xlu0 %275
    %vm277 = vcmask 785920
    %s278 = scalar_lea.vmem %s1, 24
    %279 = vst.msk [vmem:[%s278] sm:$0xff] %vm277, %v276
    %s280 = scalar_lea.vmem [#allocation0], 1
    %v281 = vld [vmem:[%s280] ss:$8 sm:$0xf]
    %s282 = scalar_lea.vmem [#allocation0], 1
    %v283 = vld [vmem:[%s282] ss:$8 sm:$0xf0]
    %vm284 = vcmask 1047556
    %v285 = vsel %vm284, %v283, %v281
    %286 = vrot.lane.b32.xlu0 %v285, 32
    %v287 = vpop.permute.xlu0 %286
    %vm288 = vcmask 523520
    %289 = vst.msk [vmem:[%s1] sm:$0xff] %vm288, %v287
    %s290 = scalar_lea.vmem [#allocation0], 65
    %v291 = vld [vmem:[%s290] ss:$8 sm:$0xf]
    %s292 = scalar_lea.vmem [#allocation0], 65
    %v293 = vld [vmem:[%s292] ss:$8 sm:$0xf0]
    %vm294 = vcmask 1047556
    %v295 = vsel %vm294, %v293, %v291
    %296 = vrot.lane.b32.xlu0 %v295, 32
    %v297 = vpop.permute.xlu0 %296
    %vm298 = vcmask 523520
    %s299 = scalar_lea.vmem %s1, 8
    %300 = vst.msk [vmem:[%s299] sm:$0xff] %vm298, %v297
    %s301 = scalar_lea.vmem [#allocation0], 129
    %v302 = vld [vmem:[%s301] ss:$8 sm:$0xf]
    %s303 = scalar_lea.vmem [#allocation0], 129
    %v304 = vld [vmem:[%s303] ss:$8 sm:$0xf0]
    %vm305 = vcmask 1047556
    %v306 = vsel %vm305, %v304, %v302
    %307 = vrot.lane.b32.xlu0 %v306, 32
    %v308 = vpop.permute.xlu0 %307
    %vm309 = vcmask 523520
    %s310 = scalar_lea.vmem %s1, 16
    %311 = vst.msk [vmem:[%s310] sm:$0xff] %vm309, %v308
    %s312 = scalar_lea.vmem [#allocation0], 193
    %v313 = vld [vmem:[%s312] ss:$8 sm:$0xf]
    %s314 = scalar_lea.vmem [#allocation0], 193
    %v315 = vld [vmem:[%s314] ss:$8 sm:$0xf0]
    %vm316 = vcmask 1047556
    %v317 = vsel %vm316, %v315, %v313
    %318 = vrot.lane.b32.xlu0 %v317, 32
    %v319 = vpop.permute.xlu0 %318
    %vm320 = vcmask 523520
    %s321 = scalar_lea.vmem %s1, 24
    %322 = vst.msk [vmem:[%s321] sm:$0xff] %vm320, %v319

// kernel: tile.29
$region0: #{tile.29}
  %s0 = inlined_call_operand.vmem [shape: f32[8,4,32], index: 0, kind: input, shape index: {}]
  %s1 = inlined_call_operand.vmem [shape: f32[8,128], index: 1, kind: output, shape index: {}]
  $region1: #{tile.29} parent=0
    #allocation0 [shape = 'u8[32768]{0}', space=vmem, size = 0x8000, scoped, tag = 'scoped mem for input reshape']
    %s3 = sshll.u32 1, 4
    %s4 = ssub.s32 %s3, 1
    %s5 = smul.addr 4, 7
    %s6 = scalar_lea.vmem %s0, %s5
    %v7 = vld [vmem:[%s6] sm:%s4]
    %s8 = scalar_lea.vmem [#allocation0], 56
    %9 = vst [vmem:[%s8] sm:%s4] %v7
    %s10 = smul.addr 4, 6
    %s11 = scalar_lea.vmem %s0, %s10
    %v12 = vld [vmem:[%s11] sm:%s4]
    %s13 = scalar_lea.vmem [#allocation0], 48
    %14 = vst [vmem:[%s13] sm:%s4] %v12
    %s15 = smul.addr 4, 5
    %s16 = scalar_lea.vmem %s0, %s15
    %v17 = vld [vmem:[%s16] sm:%s4]
    %s18 = scalar_lea.vmem [#allocation0], 40
    %19 = vst [vmem:[%s18] sm:%s4] %v17
    %s20 = smul.addr 4, 4
    %s21 = scalar_lea.vmem %s0, %s20
    %v22 = vld [vmem:[%s21] sm:%s4]
    %s23 = scalar_lea.vmem [#allocation0], 32
    %24 = vst [vmem:[%s23] sm:%s4] %v22
    %s25 = smul.addr 4, 3
    %s26 = scalar_lea.vmem %s0, %s25
    %v27 = vld [vmem:[%s26] sm:%s4]
    %s28 = scalar_lea.vmem [#allocation0], 24
    %29 = vst [vmem:[%s28] sm:%s4] %v27
    %s30 = smul.addr 4, 2
    %s31 = scalar_lea.vmem %s0, %s30
    %v32 = vld [vmem:[%s31] sm:%s4]
    %s33 = scalar_lea.vmem [#allocation0], 16
    %34 = vst [vmem:[%s33] sm:%s4] %v32
    %s35 = scalar_lea.vmem %s0, 4
    %v36 = vld [vmem:[%s35] sm:%s4]
    %s37 = scalar_lea.vmem [#allocation0], 8
    %38 = vst [vmem:[%s37] sm:%s4] %v36
    %v39 = vld [vmem:[%s0] sm:%s4]
    %40 = vst [vmem:[#allocation0] sm:%s4] %v39
    %v41 = vld [vmem:[#allocation0] ss:$8 sm:$0xf]
    %v42 = vld [vmem:[#allocation0] ss:$8 sm:$0xf0]
    %vm43 = vcmask 1047556
    %v44 = vsel %vm43, %v42, %v41
    %vm45 = vcmask 261120
    %46 = vst.msk [vmem:[%s1] sm:$0xff] %vm45, %v44
    %s47 = scalar_lea.vmem [#allocation0], 3
    %v48 = vld [vmem:[%s47] ss:$8 sm:$0xf]
    %s49 = scalar_lea.vmem [#allocation0], 3
    %v50 = vld [vmem:[%s49] ss:$8 sm:$0xf0]
    %vm51 = vcmask 1047556
    %v52 = vsel %vm51, %v50, %v48
    %53 = vrot.lane.b32.xlu0 %v52, 96
    %v54 = vpop.permute.xlu0 %53
    %vm55 = vcmask 1048320
    %56 = vst.msk [vmem:[%s1] sm:$0xff] %vm55, %v54
    %s57 = scalar_lea.vmem [#allocation0], 2
    %v58 = vld [vmem:[%s57] ss:$8 sm:$0xf]
    %s59 = scalar_lea.vmem [#allocation0], 2
    %v60 = vld [vmem:[%s59] ss:$8 sm:$0xf0]
    %vm61 = vcmask 1047556
    %v62 = vsel %vm61, %v60, %v58
    %63 = vrot.lane.b32.xlu0 %v62, 64
    %v64 = vpop.permute.xlu0 %63
    %vm65 = vcmask 785920
    %66 = vst.msk [vmem:[%s1] sm:$0xff] %vm65, %v64
    %s67 = scalar_lea.vmem [#allocation0], 1
    %v68 = vld [vmem:[%s67] ss:$8 sm:$0xf]
    %s69 = scalar_lea.vmem [#allocation0], 1
    %v70 = vld [vmem:[%s69] ss:$8 sm:$0xf0]
    %vm71 = vcmask 1047556
    %v72 = vsel %vm71, %v70, %v68
    %73 = vrot.lane.b32.xlu0 %v72, 32
    %v74 = vpop.permute.xlu0 %73
    %vm75 = vcmask 523520
    %76 = vst.msk [vmem:[%s1] sm:$0xff] %vm75, %v74

// kernel: din_forward.1
$region0: #{din_forward.1}
  #allocation0 [shape = 'u32[]', space=smem, size = 0x4, offset = 0x4, fixed_abs, tag = 'smem constant byte address 0x4 - core index']
  #allocation1 [shape = 'u32[144,128]{1,0:T(1,128)}', space=vmem, size = 0x12000, scoped, tag = 'internal scratch']
  #allocation2 [shape = 'f32[8,128]{1,0:T(8,128)}', space=vmem, size = 0x1000, scoped, tag = 'scratch operand']
  #allocation3 [shape = 'f32[8,128]{1,0:T(8,128)}', space=vmem, size = 0x1000, scoped, tag = 'scratch operand']
  #allocation4 [shape = 'f32[1,1]{1,0:T(1,128)S(1)}', space=vmem, size = 0x200, scoped, tag = 'scoped memory for din_forward.1']
  %s0 = inlined_call_operand.vmem [shape: bf16[16,128], index: 0, kind: input, shape index: {}]
  %s1 = inlined_call_operand.vmem [shape: f32[8,128], index: 1, kind: input, shape index: {}]
  %s2 = inlined_call_operand.vmem [shape: f32[8,32], index: 2, kind: input, shape index: {}]
  %s3 = inlined_call_operand.vmem [shape: f32[8,32], index: 3, kind: input, shape index: {}]
  %s4 = inlined_call_operand.vmem [shape: f32[256,128], index: 4, kind: input, shape index: {}]
  %s5 = inlined_call_operand.vmem [shape: f32[32,128], index: 5, kind: input, shape index: {}]
  %s6 = inlined_call_operand.vmem [shape: f32[1,128], index: 6, kind: input, shape index: {}]
  %s7 = inlined_call_operand.vmem [shape: f32[128,128], index: 7, kind: input, shape index: {}]
  %s8 = inlined_call_operand.<no memory space> [shape: f32[1,1], index: 8, kind: input, shape index: {}]
  %s9 = inlined_call_operand.vmem [shape: f32[128,80], index: 9, kind: input, shape index: {}]
  %s10 = inlined_call_operand.vmem [shape: f32[1,80], index: 10, kind: input, shape index: {}]
  %s11 = inlined_call_operand.vmem [shape: f32[1,80], index: 11, kind: input, shape index: {}]
  %s12 = inlined_call_operand.vmem [shape: f32[80,40], index: 12, kind: input, shape index: {}]
  %s13 = inlined_call_operand.vmem [shape: f32[1,40], index: 13, kind: input, shape index: {}]
  %s14 = inlined_call_operand.vmem [shape: f32[1,40], index: 14, kind: input, shape index: {}]
  %s15 = inlined_call_operand.vmem [shape: f32[40,128], index: 15, kind: input, shape index: {}]
  %s16 = inlined_call_operand.vmem [shape: f32[1,128], index: 16, kind: input, shape index: {}]
  %s17 = inlined_call_operand.vmem [shape: f32[8,128], index: 17, kind: output, shape index: {}]
  %s18 = sld [smem:[#allocation0]]
  $region109: #{din_forward.1} parent=0
    _
  %s20 = ssub.s32 1, %s18
  %s21 = scalar_select 0, %s20, %s18
  %v22 = vstv %s8
  %23 = vst [vmem:[#allocation4] sm:$0x1] %v22
  loop: start=0, step=1, limit=4
  $region2: #{din_forward.1} parent=0 // loop_pre_header
    _
  $region3: #{din_forward.1} parent=0 // loop_header
    %s25 = sphi 0, %s29
    %p26 = scmp.ge.s32.totalorder %s25, 4
    %s35 = sphi 0, %s37
    %s38 = sphi 0, %s35
    %s39 = sphi 0, %s38
    %s55 = sphi 0, %s39
    %s59 = sphi 0, %s59
    %s61 = sphi 0, %s59
    %s62 = sphi 0, %s61
    %s76 = sphi 0, %s62
    %s80 = sphi 0, %s80
    %s82 = sphi 0, %s80
    %s83 = sphi 0, %s82
    %s97 = sphi 0, %s83
    %s101 = sphi 0, %s101
    %s103 = sphi 0, %s101
    %s104 = sphi 0, %s103
    %s118 = sphi 0, %s104
    %s122 = sphi 0, %s122
    %s124 = sphi 0, %s122
    %s125 = sphi 0, %s124
    %s139 = sphi 0, %s125
    %s143 = sphi 0, %s143
    %s145 = sphi 0, %s143
    %s146 = sphi 0, %s145
    %s160 = sphi 0, %s146
    %s164 = sphi 0, %s164
    %s166 = sphi 0, %s164
    %s167 = sphi 0, %s166
    %s181 = sphi 0, %s167
    %s185 = sphi 0, %s185
    %s187 = sphi 0, %s185
    %s188 = sphi 0, %s187
    %s202 = sphi 0, %s188
    %s206 = sphi 0, %s206
    %s208 = sphi 0, %s206
    %s209 = sphi 0, %s208
    %s223 = sphi 0, %s209
    %s227 = sphi 0, %s227
    %s229 = sphi 0, %s227
    %s230 = sphi 0, %s229
    %s244 = sphi 0, %s230
    %s248 = sphi 0, %s248
    %s250 = sphi 0, %s248
    %s251 = sphi 0, %s250
    %s265 = sphi 0, %s251
    %s269 = sphi 0, %s269
    %s271 = sphi 0, %s269
    %s272 = sphi 0, %s271
    %s286 = sphi 0, %s272
    %s290 = sphi 0, %s290
    %s292 = sphi 0, %s290
    %s293 = sphi 0, %s292
    %s307 = sphi 0, %s293
    %s311 = sphi 0, %s311
    %s313 = sphi 0, %s311
    %s314 = sphi 0, %s313
    %s328 = sphi 0, %s314
    %s332 = sphi 0, %s332
    %s334 = sphi 0, %s332
    %s335 = sphi 0, %s334
    %s349 = sphi 0, %s335
    %s353 = sphi 0, %s353
    %s355 = sphi 0, %s353
    %s356 = sphi 0, %s355
    %s370 = sphi 0, %s356
    %s374 = sphi 0, %s374
    %s376 = sphi 0, %s374
    %s377 = sphi 0, %s376
    %s391 = sphi 0, %s377
    %s395 = sphi 0, %s395
    %s397 = sphi 0, %s395
    %s398 = sphi 0, %s397
    %s412 = sphi 0, %s398
  $region4: #{din_forward.1} parent=0 // loop_header_branch
    %28 = sbr.rel (%p26) target = $region8
  $region5: #{din_forward.1} parent=0 // loop_body
    %s30 = ssub.s32 %s25, 1
    %s31 = ssub.s32 %s25, 2
    %s32 = sadd.s32 %s25, 1
    %s33 = ssub.s32 %s25, %s32
    %p34 = scmp.eq.s32.totalorder %s33, 0
    %s36 = sadd.s32 %s35, 1
    %s37 = scalar_select %p34, %s35, %s36
    %p40 = pneg %p34
    %p41 = scmp.eq.s32.totalorder %s25, 1
    %p42 = por %p40, %p41
    %p43 = scmp.ne.s32.totalorder %s35, %s38
    %p44 = scmp.eq.s32.totalorder %s25, 0
    %p45 = por %p43, %p44
    %p46 = scmp.ne.s32.totalorder %s35, %s38
    %p47 = scmp.eq.s32.totalorder %s30, 1
    %p48 = por %p46, %p47
    %p49 = scmp.ne.s32.totalorder %s38, %s39
    %p50 = scmp.eq.s32.totalorder %s30, 0
    %p51 = por %p49, %p50
    %p52 = scmp.ne.s32.totalorder %s38, %s39
    %p53 = scmp.eq.s32.totalorder %s31, 1
    %p54 = por %p52, %p53
    %p56 = scmp.ne.s32.totalorder %s39, %s55
    %p57 = scmp.eq.s32.totalorder %s31, 0
    %p58 = por %p56, %p57
    %s60 = sadd.s32 %s59, 1
    %p63 = scmp.eq.s32.totalorder %s25, 1
    %p64 = scmp.ne.s32.totalorder %s59, %s61
    %p65 = scmp.eq.s32.totalorder %s25, 0
    %p66 = por %p64, %p65
    %p67 = scmp.ne.s32.totalorder %s59, %s61
    %p68 = scmp.eq.s32.totalorder %s30, 1
    %p69 = por %p67, %p68
    %p70 = scmp.ne.s32.totalorder %s61, %s62
    %p71 = scmp.eq.s32.totalorder %s30, 0
    %p72 = por %p70, %p71
    %p73 = scmp.ne.s32.totalorder %s61, %s62
    %p74 = scmp.eq.s32.totalorder %s31, 1
    %p75 = por %p73, %p74
    %p77 = scmp.ne.s32.totalorder %s62, %s76
    %p78 = scmp.eq.s32.totalorder %s31, 0
    %p79 = por %p77, %p78
    %s81 = sadd.s32 %s80, 1
    %p84 = scmp.eq.s32.totalorder %s25, 1
    %p85 = scmp.ne.s32.totalorder %s80, %s82
    %p86 = scmp.eq.s32.totalorder %s25, 0
    %p87 = por %p85, %p86
    %p88 = scmp.ne.s32.totalorder %s80, %s82
    %p89 = scmp.eq.s32.totalorder %s30, 1
    %p90 = por %p88, %p89
    %p91 = scmp.ne.s32.totalorder %s82, %s83
    %p92 = scmp.eq.s32.totalorder %s30, 0
    %p93 = por %p91, %p92
    %p94 = scmp.ne.s32.totalorder %s82, %s83
    %p95 = scmp.eq.s32.totalorder %s31, 1
    %p96 = por %p94, %p95
    %p98 = scmp.ne.s32.totalorder %s83, %s97
    %p99 = scmp.eq.s32.totalorder %s31, 0
    %p100 = por %p98, %p99
    %s102 = sadd.s32 %s101, 1
    %p105 = scmp.eq.s32.totalorder %s25, 1
    %p106 = scmp.ne.s32.totalorder %s101, %s103
    %p107 = scmp.eq.s32.totalorder %s25, 0
    %p108 = por %p106, %p107
    %p109 = scmp.ne.s32.totalorder %s101, %s103
    %p110 = scmp.eq.s32.totalorder %s30, 1
    %p111 = por %p109, %p110
    %p112 = scmp.ne.s32.totalorder %s103, %s104
    %p113 = scmp.eq.s32.totalorder %s30, 0
    %p114 = por %p112, %p113
    %p115 = scmp.ne.s32.totalorder %s103, %s104
    %p116 = scmp.eq.s32.totalorder %s31, 1
    %p117 = por %p115, %p116
    %p119 = scmp.ne.s32.totalorder %s104, %s118
    %p120 = scmp.eq.s32.totalorder %s31, 0
    %p121 = por %p119, %p120
    %s123 = sadd.s32 %s122, 1
    %p126 = scmp.eq.s32.totalorder %s25, 1
    %p127 = scmp.ne.s32.totalorder %s122, %s124
    %p128 = scmp.eq.s32.totalorder %s25, 0
    %p129 = por %p127, %p128
    %p130 = scmp.ne.s32.totalorder %s122, %s124
    %p131 = scmp.eq.s32.totalorder %s30, 1
    %p132 = por %p130, %p131
    %p133 = scmp.ne.s32.totalorder %s124, %s125
    %p134 = scmp.eq.s32.totalorder %s30, 0
    %p135 = por %p133, %p134
    %p136 = scmp.ne.s32.totalorder %s124, %s125
    %p137 = scmp.eq.s32.totalorder %s31, 1
    %p138 = por %p136, %p137
    %p140 = scmp.ne.s32.totalorder %s125, %s139
    %p141 = scmp.eq.s32.totalorder %s31, 0
    %p142 = por %p140, %p141
    %s144 = sadd.s32 %s143, 1
    %p147 = scmp.eq.s32.totalorder %s25, 1
    %p148 = scmp.ne.s32.totalorder %s143, %s145
    %p149 = scmp.eq.s32.totalorder %s25, 0
    %p150 = por %p148, %p149
    %p151 = scmp.ne.s32.totalorder %s143, %s145
    %p152 = scmp.eq.s32.totalorder %s30, 1
    %p153 = por %p151, %p152
    %p154 = scmp.ne.s32.totalorder %s145, %s146
    %p155 = scmp.eq.s32.totalorder %s30, 0
    %p156 = por %p154, %p155
    %p157 = scmp.ne.s32.totalorder %s145, %s146
    %p158 = scmp.eq.s32.totalorder %s31, 1
    %p159 = por %p157, %p158
    %p161 = scmp.ne.s32.totalorder %s146, %s160
    %p162 = scmp.eq.s32.totalorder %s31, 0
    %p163 = por %p161, %p162
    %s165 = sadd.s32 %s164, 1
    %p168 = scmp.eq.s32.totalorder %s25, 1
    %p169 = scmp.ne.s32.totalorder %s164, %s166
    %p170 = scmp.eq.s32.totalorder %s25, 0
    %p171 = por %p169, %p170
    %p172 = scmp.ne.s32.totalorder %s164, %s166
    %p173 = scmp.eq.s32.totalorder %s30, 1
    %p174 = por %p172, %p173
    %p175 = scmp.ne.s32.totalorder %s166, %s167
    %p176 = scmp.eq.s32.totalorder %s30, 0
    %p177 = por %p175, %p176
    %p178 = scmp.ne.s32.totalorder %s166, %s167
    %p179 = scmp.eq.s32.totalorder %s31, 1
    %p180 = por %p178, %p179
    %p182 = scmp.ne.s32.totalorder %s167, %s181
    %p183 = scmp.eq.s32.totalorder %s31, 0
    %p184 = por %p182, %p183
    %s186 = sadd.s32 %s185, 1
    %p189 = scmp.eq.s32.totalorder %s25, 1
    %p190 = scmp.ne.s32.totalorder %s185, %s187
    %p191 = scmp.eq.s32.totalorder %s25, 0
    %p192 = por %p190, %p191
    %p193 = scmp.ne.s32.totalorder %s185, %s187
    %p194 = scmp.eq.s32.totalorder %s30, 1
    %p195 = por %p193, %p194
    %p196 = scmp.ne.s32.totalorder %s187, %s188
    %p197 = scmp.eq.s32.totalorder %s30, 0
    %p198 = por %p196, %p197
    %p199 = scmp.ne.s32.totalorder %s187, %s188
    %p200 = scmp.eq.s32.totalorder %s31, 1
    %p201 = por %p199, %p200
    %p203 = scmp.ne.s32.totalorder %s188, %s202
    %p204 = scmp.eq.s32.totalorder %s31, 0
    %p205 = por %p203, %p204
    %s207 = sadd.s32 %s206, 1
    %p210 = scmp.eq.s32.totalorder %s25, 1
    %p211 = scmp.ne.s32.totalorder %s206, %s208
    %p212 = scmp.eq.s32.totalorder %s25, 0
    %p213 = por %p211, %p212
    %p214 = scmp.ne.s32.totalorder %s206, %s208
    %p215 = scmp.eq.s32.totalorder %s30, 1
    %p216 = por %p214, %p215
    %p217 = scmp.ne.s32.totalorder %s208, %s209
    %p218 = scmp.eq.s32.totalorder %s30, 0
    %p219 = por %p217, %p218
    %p220 = scmp.ne.s32.totalorder %s208, %s209
    %p221 = scmp.eq.s32.totalorder %s31, 1
    %p222 = por %p220, %p221
    %p224 = scmp.ne.s32.totalorder %s209, %s223
    %p225 = scmp.eq.s32.totalorder %s31, 0
    %p226 = por %p224, %p225
    %s228 = sadd.s32 %s227, 1
    %p231 = scmp.eq.s32.totalorder %s25, 1
    %p232 = scmp.ne.s32.totalorder %s227, %s229
    %p233 = scmp.eq.s32.totalorder %s25, 0
    %p234 = por %p232, %p233
    %p235 = scmp.ne.s32.totalorder %s227, %s229
    %p236 = scmp.eq.s32.totalorder %s30, 1
    %p237 = por %p235, %p236
    %p238 = scmp.ne.s32.totalorder %s229, %s230
    %p239 = scmp.eq.s32.totalorder %s30, 0
    %p240 = por %p238, %p239
    %p241 = scmp.ne.s32.totalorder %s229, %s230
    %p242 = scmp.eq.s32.totalorder %s31, 1
    %p243 = por %p241, %p242
    %p245 = scmp.ne.s32.totalorder %s230, %s244
    %p246 = scmp.eq.s32.totalorder %s31, 0
    %p247 = por %p245, %p246
    %s249 = sadd.s32 %s248, 1
    %p252 = scmp.eq.s32.totalorder %s25, 1
    %p253 = scmp.ne.s32.totalorder %s248, %s250
    %p254 = scmp.eq.s32.totalorder %s25, 0
    %p255 = por %p253, %p254
    %p256 = scmp.ne.s32.totalorder %s248, %s250
    %p257 = scmp.eq.s32.totalorder %s30, 1
    %p258 = por %p256, %p257
    %p259 = scmp.ne.s32.totalorder %s250, %s251
    %p260 = scmp.eq.s32.totalorder %s30, 0
    %p261 = por %p259, %p260
    %p262 = scmp.ne.s32.totalorder %s250, %s251
    %p263 = scmp.eq.s32.totalorder %s31, 1
    %p264 = por %p262, %p263
    %p266 = scmp.ne.s32.totalorder %s251, %s265
    %p267 = scmp.eq.s32.totalorder %s31, 0
    %p268 = por %p266, %p267
    %s270 = sadd.s32 %s269, 1
    %p273 = scmp.eq.s32.totalorder %s25, 1
    %p274 = scmp.ne.s32.totalorder %s269, %s271
    %p275 = scmp.eq.s32.totalorder %s25, 0
    %p276 = por %p274, %p275
    %p277 = scmp.ne.s32.totalorder %s269, %s271
    %p278 = scmp.eq.s32.totalorder %s30, 1
    %p279 = por %p277, %p278
    %p280 = scmp.ne.s32.totalorder %s271, %s272
    %p281 = scmp.eq.s32.totalorder %s30, 0
    %p282 = por %p280, %p281
    %p283 = scmp.ne.s32.totalorder %s271, %s272
    %p284 = scmp.eq.s32.totalorder %s31, 1
    %p285 = por %p283, %p284
    %p287 = scmp.ne.s32.totalorder %s272, %s286
    %p288 = scmp.eq.s32.totalorder %s31, 0
    %p289 = por %p287, %p288
    %s291 = sadd.s32 %s290, 1
    %p294 = scmp.eq.s32.totalorder %s25, 1
    %p295 = scmp.ne.s32.totalorder %s290, %s292
    %p296 = scmp.eq.s32.totalorder %s25, 0
    %p297 = por %p295, %p296
    %p298 = scmp.ne.s32.totalorder %s290, %s292
    %p299 = scmp.eq.s32.totalorder %s30, 1
    %p300 = por %p298, %p299
    %p301 = scmp.ne.s32.totalorder %s292, %s293
    %p302 = scmp.eq.s32.totalorder %s30, 0
    %p303 = por %p301, %p302
    %p304 = scmp.ne.s32.totalorder %s292, %s293
    %p305 = scmp.eq.s32.totalorder %s31, 1
    %p306 = por %p304, %p305
    %p308 = scmp.ne.s32.totalorder %s293, %s307
    %p309 = scmp.eq.s32.totalorder %s31, 0
    %p310 = por %p308, %p309
    %s312 = sadd.s32 %s311, 1
    %p315 = scmp.eq.s32.totalorder %s25, 1
    %p316 = scmp.ne.s32.totalorder %s311, %s313
    %p317 = scmp.eq.s32.totalorder %s25, 0
    %p318 = por %p316, %p317
    %p319 = scmp.ne.s32.totalorder %s311, %s313
    %p320 = scmp.eq.s32.totalorder %s30, 1
    %p321 = por %p319, %p320
    %p322 = scmp.ne.s32.totalorder %s313, %s314
    %p323 = scmp.eq.s32.totalorder %s30, 0
    %p324 = por %p322, %p323
    %p325 = scmp.ne.s32.totalorder %s313, %s314
    %p326 = scmp.eq.s32.totalorder %s31, 1
    %p327 = por %p325, %p326
    %p329 = scmp.ne.s32.totalorder %s314, %s328
    %p330 = scmp.eq.s32.totalorder %s31, 0
    %p331 = por %p329, %p330
    %s333 = sadd.s32 %s332, 1
    %p336 = scmp.eq.s32.totalorder %s25, 1
    %p337 = scmp.ne.s32.totalorder %s332, %s334
    %p338 = scmp.eq.s32.totalorder %s25, 0
    %p339 = por %p337, %p338
    %p340 = scmp.ne.s32.totalorder %s332, %s334
    %p341 = scmp.eq.s32.totalorder %s30, 1
    %p342 = por %p340, %p341
    %p343 = scmp.ne.s32.totalorder %s334, %s335
    %p344 = scmp.eq.s32.totalorder %s30, 0
    %p345 = por %p343, %p344
    %p346 = scmp.ne.s32.totalorder %s334, %s335
    %p347 = scmp.eq.s32.totalorder %s31, 1
    %p348 = por %p346, %p347
    %p350 = scmp.ne.s32.totalorder %s335, %s349
    %p351 = scmp.eq.s32.totalorder %s31, 0
    %p352 = por %p350, %p351
    %s354 = sadd.s32 %s353, 1
    %p357 = scmp.eq.s32.totalorder %s25, 1
    %p358 = scmp.ne.s32.totalorder %s353, %s355
    %p359 = scmp.eq.s32.totalorder %s25, 0
    %p360 = por %p358, %p359
    %p361 = scmp.ne.s32.totalorder %s353, %s355
    %p362 = scmp.eq.s32.totalorder %s30, 1
    %p363 = por %p361, %p362
    %p364 = scmp.ne.s32.totalorder %s355, %s356
    %p365 = scmp.eq.s32.totalorder %s30, 0
    %p366 = por %p364, %p365
    %p367 = scmp.ne.s32.totalorder %s355, %s356
    %p368 = scmp.eq.s32.totalorder %s31, 1
    %p369 = por %p367, %p368
    %p371 = scmp.ne.s32.totalorder %s356, %s370
    %p372 = scmp.eq.s32.totalorder %s31, 0
    %p373 = por %p371, %p372
    %s375 = sadd.s32 %s374, 1
    %p378 = scmp.eq.s32.totalorder %s25, 1
    %p379 = scmp.ne.s32.totalorder %s374, %s376
    %p380 = scmp.eq.s32.totalorder %s25, 0
    %p381 = por %p379, %p380
    %p382 = scmp.ne.s32.totalorder %s374, %s376
    %p383 = scmp.eq.s32.totalorder %s30, 1
    %p384 = por %p382, %p383
    %p385 = scmp.ne.s32.totalorder %s376, %s377
    %p386 = scmp.eq.s32.totalorder %s30, 0
    %p387 = por %p385, %p386
    %p388 = scmp.ne.s32.totalorder %s376, %s377
    %p389 = scmp.eq.s32.totalorder %s31, 1
    %p390 = por %p388, %p389
    %p392 = scmp.ne.s32.totalorder %s377, %s391
    %p393 = scmp.eq.s32.totalorder %s31, 0
    %p394 = por %p392, %p393
    %s396 = sadd.s32 %s395, 1
    %p399 = scmp.eq.s32.totalorder %s25, 1
    %p400 = scmp.ne.s32.totalorder %s395, %s397
    %p401 = scmp.eq.s32.totalorder %s25, 0
    %p402 = por %p400, %p401
    %p403 = scmp.ne.s32.totalorder %s395, %s397
    %p404 = scmp.eq.s32.totalorder %s30, 1
    %p405 = por %p403, %p404
    %p406 = scmp.ne.s32.totalorder %s397, %s398
    %p407 = scmp.eq.s32.totalorder %s30, 0
    %p408 = por %p406, %p407
    %p409 = scmp.ne.s32.totalorder %s397, %s398
    %p410 = scmp.eq.s32.totalorder %s31, 1
    %p411 = por %p409, %p410
    %p413 = scmp.ne.s32.totalorder %s398, %s412
    %p414 = scmp.eq.s32.totalorder %s31, 0
    %p415 = por %p413, %p414
    %p416 = scmp.le.s32.totalorder 1, %s25
    %p417 = scmp.lt.s32.totalorder %s25, 3
    %p418 = pnand %p416, %p417
    %p419 = pneg %p418
    // Predicated region
    $region9: #{din_forward.1} parent=5 // pred_check
      _
    $region10: #{din_forward.1} parent=5 // pred_check_branch
      %421 = sbr.rel (%p418) target = $region12
    $region11: #{din_forward.1} parent=5 // pred_region
      %s422 = ssub.s32 %s25, 1
      // Predicated region
      $region13: #{din_forward.1} parent=11 // pred_check
        %p423 = pneg %p72
      $region14: #{din_forward.1} parent=11 // pred_check_branch
        %425 = sbr.rel (%p423) target = $region16
      $region15: #{din_forward.1} parent=11 // pred_region
        _
      $region16: #{din_forward.1} parent=11 // pred_fallthru
        _
      // Predicated region
      $region17: #{din_forward.1} parent=11 // pred_check
        %p426 = pneg %p93
      $region18: #{din_forward.1} parent=11 // pred_check_branch
        %428 = sbr.rel (%p426) target = $region20
      $region19: #{din_forward.1} parent=11 // pred_region
        _
      $region20: #{din_forward.1} parent=11 // pred_fallthru
        _
      // Predicated region
      $region21: #{din_forward.1} parent=11 // pred_check
        %p429 = pneg %p114
      $region22: #{din_forward.1} parent=11 // pred_check_branch
        %431 = sbr.rel (%p429) target = $region24
      $region23: #{din_forward.1} parent=11 // pred_region
        _
      $region24: #{din_forward.1} parent=11 // pred_fallthru
        _
      // Predicated region
      $region25: #{din_forward.1} parent=11 // pred_check
        %p432 = pneg %p135
      $region26: #{din_forward.1} parent=11 // pred_check_branch
        %434 = sbr.rel (%p432) target = $region28
      $region27: #{din_forward.1} parent=11 // pred_region
        _
      $region28: #{din_forward.1} parent=11 // pred_fallthru
        _
      // Predicated region
      $region29: #{din_forward.1} parent=11 // pred_check
        %p435 = pneg %p156
      $region30: #{din_forward.1} parent=11 // pred_check_branch
        %437 = sbr.rel (%p435) target = $region32
      $region31: #{din_forward.1} parent=11 // pred_region
        _
      $region32: #{din_forward.1} parent=11 // pred_fallthru
        _
      // Predicated region
      $region33: #{din_forward.1} parent=11 // pred_check
        %p438 = pneg %p177
      $region34: #{din_forward.1} parent=11 // pred_check_branch
        %440 = sbr.rel (%p438) target = $region36
      $region35: #{din_forward.1} parent=11 // pred_region
        _
      $region36: #{din_forward.1} parent=11 // pred_fallthru
        _
      // Predicated region
      $region37: #{din_forward.1} parent=11 // pred_check
        %p441 = pneg %p198
      $region38: #{din_forward.1} parent=11 // pred_check_branch
        %443 = sbr.rel (%p441) target = $region40
      $region39: #{din_forward.1} parent=11 // pred_region
        _
      $region40: #{din_forward.1} parent=11 // pred_fallthru
        _
      // Predicated region
      $region41: #{din_forward.1} parent=11 // pred_check
        %p444 = pneg %p219
      $region42: #{din_forward.1} parent=11 // pred_check_branch
        %446 = sbr.rel (%p444) target = $region44
      $region43: #{din_forward.1} parent=11 // pred_region
        _
      $region44: #{din_forward.1} parent=11 // pred_fallthru
        _
      // Predicated region
      $region45: #{din_forward.1} parent=11 // pred_check
        %p447 = pneg %p240
      $region46: #{din_forward.1} parent=11 // pred_check_branch
        %449 = sbr.rel (%p447) target = $region48
      $region47: #{din_forward.1} parent=11 // pred_region
        _
      $region48: #{din_forward.1} parent=11 // pred_fallthru
        _
      // Predicated region
      $region49: #{din_forward.1} parent=11 // pred_check
        %p450 = pneg %p261
      $region50: #{din_forward.1} parent=11 // pred_check_branch
        %452 = sbr.rel (%p450) target = $region52
      $region51: #{din_forward.1} parent=11 // pred_region
        _
      $region52: #{din_forward.1} parent=11 // pred_fallthru
        _
      // Predicated region
      $region53: #{din_forward.1} parent=11 // pred_check
        %p453 = pneg %p282
      $region54: #{din_forward.1} parent=11 // pred_check_branch
        %455 = sbr.rel (%p453) target = $region56
      $region55: #{din_forward.1} parent=11 // pred_region
        _
      $region56: #{din_forward.1} parent=11 // pred_fallthru
        _
      // Predicated region
      $region57: #{din_forward.1} parent=11 // pred_check
        %p456 = pneg %p303
      $region58: #{din_forward.1} parent=11 // pred_check_branch
        %458 = sbr.rel (%p456) target = $region60
      $region59: #{din_forward.1} parent=11 // pred_region
        _
      $region60: #{din_forward.1} parent=11 // pred_fallthru
        _
      // Predicated region
      $region61: #{din_forward.1} parent=11 // pred_check
        %p459 = pneg %p324
      $region62: #{din_forward.1} parent=11 // pred_check_branch
        %461 = sbr.rel (%p459) target = $region64
      $region63: #{din_forward.1} parent=11 // pred_region
        _
      $region64: #{din_forward.1} parent=11 // pred_fallthru
        _
      // Predicated region
      $region65: #{din_forward.1} parent=11 // pred_check
        %p462 = pneg %p345
      $region66: #{din_forward.1} parent=11 // pred_check_branch
        %464 = sbr.rel (%p462) target = $region68
      $region67: #{din_forward.1} parent=11 // pred_region
        _
      $region68: #{din_forward.1} parent=11 // pred_fallthru
        _
      // Predicated region
      $region69: #{din_forward.1} parent=11 // pred_check
        %p465 = pneg %p366
      $region70: #{din_forward.1} parent=11 // pred_check_branch
        %467 = sbr.rel (%p465) target = $region72
      $region71: #{din_forward.1} parent=11 // pred_region
        _
      $region72: #{din_forward.1} parent=11 // pred_fallthru
        _
      // Predicated region
      $region73: #{din_forward.1} parent=11 // pred_check
        %p468 = pneg %p387
      $region74: #{din_forward.1} parent=11 // pred_check_branch
        %470 = sbr.rel (%p468) target = $region76
      $region75: #{din_forward.1} parent=11 // pred_region
        _
      $region76: #{din_forward.1} parent=11 // pred_fallthru
        _
    $region12: #{din_forward.1} parent=5 // pred_fallthru
      _
    %p471 = scmp.lt.s32.totalorder %s25, 2
    // Predicated region
    $region77: #{din_forward.1} parent=5 // pred_check
      %p472 = pneg %p471
    $region78: #{din_forward.1} parent=5 // pred_check_branch
      %474 = sbr.rel (%p472) target = $region80
    $region79: #{din_forward.1} parent=5 // pred_region
      // Predicated region
      $region81: #{din_forward.1} parent=79 // pred_check
        %p475 = pneg %p45
      $region82: #{din_forward.1} parent=79 // pred_check_branch
        %477 = sbr.rel (%p475) target = $region84
      $region83: #{din_forward.1} parent=79 // pred_region
        %p478 = scmp.lt.s32.totalorder %s25, 1
        %s479 = scalar_select %p478, %s25, 1
        %s480 = smul.addr %s479, 4
        %s481 = scalar_lea.vmem %s0, %s480
      $region84: #{din_forward.1} parent=79 // pred_fallthru
        _
    $region80: #{din_forward.1} parent=5 // pred_fallthru
      _
    %p482 = scmp.le.s32.totalorder 1, %s25
    %p483 = scmp.lt.s32.totalorder %s25, 3
    %p484 = pnand %p482, %p483
    %p485 = pneg %p484
    // Predicated region
    $region85: #{din_forward.1} parent=5 // pred_check
      _
    $region86: #{din_forward.1} parent=5 // pred_check_branch
      %487 = sbr.rel (%p484) target = $region88
    $region87: #{din_forward.1} parent=5 // pred_region
      %s488 = ssub.s32 %s25, 1
      %p489 = scmp.lt.s32.totalorder %s30, 1
      %s490 = scalar_select %p489, %s30, 1
      %s491 = smul.addr %s490, 4
      %s492 = scalar_lea.vmem %s0, %s491
      %p493 = pneg %p51
      %p494 = pneg %p48
      %p495 = pneg %p72
      %p496 = pneg %p69
      %p497 = pneg %p93
      %p498 = pneg %p90
      %p499 = pneg %p114
      %p500 = pneg %p111
      %p501 = pneg %p135
      %p502 = pneg %p132
      %p503 = pneg %p156
      %p504 = pneg %p153
      %p505 = pneg %p177
      %p506 = pneg %p174
      %p507 = pneg %p198
      %p508 = pneg %p195
      %p509 = pneg %p219
      %p510 = pneg %p216
      %p511 = pneg %p240
      %p512 = pneg %p237
      %p513 = pneg %p261
      %p514 = pneg %p258
      %p515 = pneg %p282
      %p516 = pneg %p279
      %p517 = pneg %p303
      %p518 = pneg %p300
      %p519 = pneg %p324
      %p520 = pneg %p321
      %p521 = pneg %p345
      %p522 = pneg %p342
      %p523 = pneg %p366
      %p524 = pneg %p363
      %p525 = pneg %p387
      %p526 = pneg %p384
      %p527 = pneg %p408
      %p528 = pneg %p405
      %p529 = scmp.lt.s32.totalorder %s30, 1
      %s530 = scalar_select %p529, %s30, 1
      %s531 = smul.addr %s530, 4
      %s532 = scalar_lea.vmem %s0, %s531
      %v533 = vld [vmem:[%s1] sm:$0xff]
      %p534 = scmp.eq.s32.totalorder %s30, 0
      // Predicated region
      $region89: #{din_forward.1} parent=87 // pred_check
        %p535 = pneg %p534
      $region90: #{din_forward.1} parent=87 // pred_check_branch
        %537 = sbr.rel (%p535) target = $region92
      $region91: #{din_forward.1} parent=87 // pred_region
        %538 = vst [vmem:[#allocation2] sm:$0xff] 0.0
        %v539 = vld [vmem:[%s5] sm:$0xff]
        %v540 = vld [vmem:[%s5 + $0x8] sm:$0xff]
        %v541 = vld [vmem:[%s5 + $0x10] sm:$0xff]
        %v542 = vld [vmem:[%s5 + $0x18] sm:$0xff]
        %v543 = vld [vmem:[%s6] sm:$0x1]
        %v545 = vlaneseq
        %v546 = vshrl.u32 %v545, 7
        %v547 = vsub.s32 0, %v546
        %v548 = vrot.slane %v543, %v547
        %vm550 = vcmask 261120
        %v552 = vsel %vm550, %v533, 0
        %554 = vmatprep.subr.mxu0 0.0
        %555 = vmatpush1.msra.mxu0 0.0
        %556 = vmatprep.subr.mxu0 0.0
        %557 = vmatpush1.msra.mxu0 0.0
        %558 = vmatprep.subr.mxu0 0.0
        %559 = vmatpush1.msra.mxu0 0.0
        %560 = vmatprep.subr.mxu0 0.0
        %561 = vmatpush1.msra.mxu0 0.0
        %562 = vmatprep.subr.mxu0 0.0
        %563 = vmatpush1.msra.mxu0 0.0
        %564 = vmatprep.subr.mxu0 0.0
        %565 = vmatpush1.msra.mxu0 0.0
        %566 = vmatprep.subr.mxu0 0.0
        %567 = vmatpush1.msra.mxu0 0.0
        %568 = vmatprep.subr.mxu0 0.0
        %569 = vmatpush1.msra.mxu0 0.0
        %570 = vmatprep.subr.mxu0 0.0
        %571 = vmatpush1.msra.mxu0 0.0
        %572 = vmatprep.subr.mxu0 0.0
        %573 = vmatpush1.msra.mxu0 0.0
        %574 = vmatprep.subr.mxu0 0.0
        %575 = vmatpush1.msra.mxu0 0.0
        %576 = vmatprep.subr.mxu0 0.0
        %577 = vmatpush1.msra.mxu0 0.0
        %578 = vmatprep.subr.mxu0 0.0
        %579 = vmatpush1.msra.mxu0 %v542
        %580 = vmatprep.subr.mxu0 0.0
        %581 = vmatpush1.msra.mxu0 %v541
        %582 = vmatprep.subr.mxu0 0.0
        %583 = vmatpush1.msra.mxu0 %v540
        %584 = vmatprep.subr.mxu0 0.0
        %585 = vmatpush1.msra.mxu0 %v539
        %586 = vmatprep.subr.mxu0 0.0
        %587 = vmatpush2.msra.mxu0 0.0
        %588 = vmatprep.subr.mxu0 0.0
        %589 = vmatpush2.msra.mxu0 0.0
        %590 = vmatprep.subr.mxu0 0.0
        %591 = vmatpush2.msra.mxu0 0.0
        %592 = vmatprep.subr.mxu0 0.0
        %593 = vmatpush2.msra.mxu0 0.0
        %594 = vmatprep.subr.mxu0 0.0
        %595 = vmatpush2.msra.mxu0 0.0
        %596 = vmatprep.subr.mxu0 0.0
        %597 = vmatpush2.msra.mxu0 0.0
        %598 = vmatprep.subr.mxu0 0.0
        %599 = vmatpush2.msra.mxu0 0.0
        %600 = vmatprep.subr.mxu0 0.0
        %601 = vmatpush2.msra.mxu0 0.0
        %602 = vmatprep.subr.mxu0 0.0
        %603 = vmatpush2.msra.mxu0 0.0
        %604 = vmatprep.subr.mxu0 0.0
        %605 = vmatpush2.msra.mxu0 0.0
        %606 = vmatprep.subr.mxu0 0.0
        %607 = vmatpush2.msra.mxu0 0.0
        %608 = vmatprep.subr.mxu0 0.0
        %609 = vmatpush2.msra.mxu0 0.0
        %610 = vmatprep.subr.mxu0 0.0
        %611 = vmatpush2.msra.mxu0 0.0
        %612 = vmatprep.subr.mxu0 0.0
        %613 = vmatpush2.msra.mxu0 0.0
        %614 = vmatprep.subr.mxu0 0.0
        %615 = vmatpush2.msra.mxu0 0.0
        %616 = vmatprep.subr.mxu0 0.0
        %617 = vmatpush2.msra.mxu0 0.0
        %618 = vmatprep.mubr.f32.mxu0 0.0
        %619 = vmatmul.mubr.f32.gmra.mxu0 %v552
        %v620 = vpop.f32.mrf.mxu0
        %v621 = vadd.f32 %v548, %v620
        %v622 = vpop.f32.mrf.mxu0
        %623 = vdwg.mxu0
        %624 = vst [vmem:[#allocation3] sm:$0xff] %v621
      $region92: #{din_forward.1} parent=87 // pred_fallthru
        _
      %v625 = vld [vmem:[%s532] sm:$0xf]
      %v626 = vunpack.c.l.bf16 %v625
      %v627 = vmul.f32 %v626, %v533
      %v628 = vld [vmem:[%s4] sm:$0xff]
      %v629 = vld [vmem:[%s4 + $0x8] sm:$0xff]
      %v630 = vld [vmem:[%s4 + $0x10] sm:$0xff]
      %v631 = vld [vmem:[%s4 + $0x18] sm:$0xff]
      %v632 = vld [vmem:[%s4 + $0x20] sm:$0xff]
      %v633 = vld [vmem:[%s4 + $0x28] sm:$0xff]
      %v634 = vld [vmem:[%s4 + $0x30] sm:$0xff]
      %v635 = vld [vmem:[%s4 + $0x38] sm:$0xff]
      %v636 = vld [vmem:[%s4 + $0x40] sm:$0xff]
      %v637 = vld [vmem:[%s4 + $0x48] sm:$0xff]
      %v638 = vld [vmem:[%s4 + $0x50] sm:$0xff]
      %v639 = vld [vmem:[%s4 + $0x58] sm:$0xff]
      %v640 = vld [vmem:[%s4 + $0x60] sm:$0xff]
      %v641 = vld [vmem:[%s4 + $0x68] sm:$0xff]
      %v642 = vld [vmem:[%s4 + $0x70] sm:$0xff]
      %v643 = vld [vmem:[%s4 + $0x78] sm:$0xff]
      %v644 = vld [vmem:[%s4 + $0x80] sm:$0xff]
      %v645 = vld [vmem:[%s4 + $0x88] sm:$0xff]
      %v646 = vld [vmem:[%s4 + $0x90] sm:$0xff]
      %v647 = vld [vmem:[%s4 + $0x98] sm:$0xff]
      %v648 = vld [vmem:[%s4 + $0xa0] sm:$0xff]
      %v649 = vld [vmem:[%s4 + $0xa8] sm:$0xff]
      %v650 = vld [vmem:[%s4 + $0xb0] sm:$0xff]
      %v651 = vld [vmem:[%s4 + $0xb8] sm:$0xff]
      %v652 = vld [vmem:[%s4 + $0xc0] sm:$0xff]
      %v653 = vld [vmem:[%s4 + $0xc8] sm:$0xff]
      %v654 = vld [vmem:[%s4 + $0xd0] sm:$0xff]
      %v655 = vld [vmem:[%s4 + $0xd8] sm:$0xff]
      %v656 = vld [vmem:[%s4 + $0xe0] sm:$0xff]
      %v657 = vld [vmem:[%s4 + $0xe8] sm:$0xff]
      %v658 = vld [vmem:[%s4 + $0xf0] sm:$0xff]
      %v659 = vld [vmem:[%s4 + $0xf8] sm:$0xff]
      %660 = vmatprep.subr.mxu0 0.0
      %661 = vmatpush1.msra.mxu0 %v643
      %662 = vmatprep.subr.mxu0 0.0
      %663 = vmatpush1.msra.mxu0 %v642
      %664 = vmatprep.subr.mxu0 0.0
      %665 = vmatpush1.msra.mxu0 %v641
      %666 = vmatprep.subr.mxu0 0.0
      %667 = vmatpush1.msra.mxu0 %v640
      %668 = vmatprep.subr.mxu0 0.0
      %669 = vmatpush1.msra.mxu0 %v639
      %670 = vmatprep.subr.mxu0 0.0
      %671 = vmatpush1.msra.mxu0 %v638
      %672 = vmatprep.subr.mxu0 0.0
      %673 = vmatpush1.msra.mxu0 %v637
      %674 = vmatprep.subr.mxu0 0.0
      %675 = vmatpush1.msra.mxu0 %v636
      %676 = vmatprep.subr.mxu0 0.0
      %677 = vmatpush1.msra.mxu0 %v635
      %678 = vmatprep.subr.mxu0 0.0
      %679 = vmatpush1.msra.mxu0 %v634
      %680 = vmatprep.subr.mxu0 0.0
      %681 = vmatpush1.msra.mxu0 %v633
      %682 = vmatprep.subr.mxu0 0.0
      %683 = vmatpush1.msra.mxu0 %v632
      %684 = vmatprep.subr.mxu0 0.0
      %685 = vmatpush1.msra.mxu0 %v631
      %686 = vmatprep.subr.mxu0 0.0
      %687 = vmatpush1.msra.mxu0 %v630
      %688 = vmatprep.subr.mxu0 0.0
      %689 = vmatpush1.msra.mxu0 %v629
      %690 = vmatprep.subr.mxu0 0.0
      %691 = vmatpush1.msra.mxu0 %v628
      %692 = vmatprep.subr.mxu0 0.0
      %693 = vmatpush2.msra.mxu0 %v659
      %694 = vmatprep.subr.mxu0 0.0
      %695 = vmatpush2.msra.mxu0 %v658
      %696 = vmatprep.subr.mxu0 0.0
      %697 = vmatpush2.msra.mxu0 %v657
      %698 = vmatprep.subr.mxu0 0.0
      %699 = vmatpush2.msra.mxu0 %v656
      %700 = vmatprep.subr.mxu0 0.0
      %701 = vmatpush2.msra.mxu0 %v655
      %702 = vmatprep.subr.mxu0 0.0
      %703 = vmatpush2.msra.mxu0 %v654
      %704 = vmatprep.subr.mxu0 0.0
      %705 = vmatpush2.msra.mxu0 %v653
      %706 = vmatprep.subr.mxu0 0.0
      %707 = vmatpush2.msra.mxu0 %v652
      %708 = vmatprep.subr.mxu0 0.0
      %709 = vmatpush2.msra.mxu0 %v651
      %710 = vmatprep.subr.mxu0 0.0
      %711 = vmatpush2.msra.mxu0 %v650
      %712 = vmatprep.subr.mxu0 0.0
      %713 = vmatpush2.msra.mxu0 %v649
      %714 = vmatprep.subr.mxu0 0.0
      %715 = vmatpush2.msra.mxu0 %v648
      %716 = vmatprep.subr.mxu0 0.0
      %717 = vmatpush2.msra.mxu0 %v647
      %718 = vmatprep.subr.mxu0 0.0
      %719 = vmatpush2.msra.mxu0 %v646
      %720 = vmatprep.subr.mxu0 0.0
      %721 = vmatpush2.msra.mxu0 %v645
      %722 = vmatprep.subr.mxu0 0.0
      %723 = vmatpush2.msra.mxu0 %v644
      %724 = vmatprep.mubr.f32.mxu0 %v627
      %725 = vmatmul.mubr.f32.gmra.mxu0 %v626
      %v726 = vpop.f32.mrf.mxu0
      %v727 = vadd.f32 0.0, %v726
      %v728 = vpop.f32.mrf.mxu0
      %729 = vdwg.mxu0
      %v730 = vld [vmem:[#allocation3] sm:$0xff]
      %v731 = vadd.f32 %v727, %v730
      %v732 = vxor.u32 %v731, 2147483648
      %v733 = vmul.f32 %v732, 1.442695
      %v734 = vpow.pop %v733
      %v735 = vadd.f32 %v734, 1.0
      %v736 = vrcp.pop %v735
      %v737 = vmul.f32 1.0, %v736
      %v738 = vld [vmem:[%s7] sm:$0xff]
      %v739 = vld [vmem:[%s7 + $0x8] sm:$0xff]
      %v740 = vld [vmem:[%s7 + $0x10] sm:$0xff]
      %v741 = vld [vmem:[%s7 + $0x18] sm:$0xff]
      %v742 = vld [vmem:[%s7 + $0x20] sm:$0xff]
      %v743 = vld [vmem:[%s7 + $0x28] sm:$0xff]
      %v744 = vld [vmem:[%s7 + $0x30] sm:$0xff]
      %v745 = vld [vmem:[%s7 + $0x38] sm:$0xff]
      %v746 = vld [vmem:[%s7 + $0x40] sm:$0xff]
      %v747 = vld [vmem:[%s7 + $0x48] sm:$0xff]
      %v748 = vld [vmem:[%s7 + $0x50] sm:$0xff]
      %v749 = vld [vmem:[%s7 + $0x58] sm:$0xff]
      %v750 = vld [vmem:[%s7 + $0x60] sm:$0xff]
      %v751 = vld [vmem:[%s7 + $0x68] sm:$0xff]
      %v752 = vld [vmem:[%s7 + $0x70] sm:$0xff]
      %v753 = vld [vmem:[%s7 + $0x78] sm:$0xff]
      %v754 = vld [vmem:[#allocation4] sm:$0x1]
      %v756 = vlaneseq
      %v757 = vshrl.u32 %v756, 7
      %v758 = vsub.s32 0, %v757
      %v759 = vrot.slane %v754, %v758
      %760 = vset.pattern.permute.xlu0 0
      %761 = vperm.xlu0 %760, %v759
      %v762 = vpop.permute.xlu0 %761
      %764 = vmatprep.subr.mxu0 0.0
      %765 = vmatpush1.msra.mxu0 %v753
      %766 = vmatprep.subr.mxu0 0.0
      %767 = vmatpush1.msra.mxu0 %v752
      %768 = vmatprep.subr.mxu0 0.0
      %769 = vmatpush1.msra.mxu0 %v751
      %770 = vmatprep.subr.mxu0 0.0
      %771 = vmatpush1.msra.mxu0 %v750
      %772 = vmatprep.subr.mxu0 0.0
      %773 = vmatpush1.msra.mxu0 %v749
      %774 = vmatprep.subr.mxu0 0.0
      %775 = vmatpush1.msra.mxu0 %v748
      %776 = vmatprep.subr.mxu0 0.0
      %777 = vmatpush1.msra.mxu0 %v747
      %778 = vmatprep.subr.mxu0 0.0
      %779 = vmatpush1.msra.mxu0 %v746
      %780 = vmatprep.subr.mxu0 0.0
      %781 = vmatpush1.msra.mxu0 %v745
      %782 = vmatprep.subr.mxu0 0.0
      %783 = vmatpush1.msra.mxu0 %v744
      %784 = vmatprep.subr.mxu0 0.0
      %785 = vmatpush1.msra.mxu0 %v743
      %786 = vmatprep.subr.mxu0 0.0
      %787 = vmatpush1.msra.mxu0 %v742
      %788 = vmatprep.subr.mxu0 0.0
      %789 = vmatpush1.msra.mxu0 %v741
      %790 = vmatprep.subr.mxu0 0.0
      %791 = vmatpush1.msra.mxu0 %v740
      %792 = vmatprep.subr.mxu0 0.0
      %793 = vmatpush1.msra.mxu0 %v739
      %794 = vmatprep.subr.mxu0 0.0
      %795 = vmatpush1.msra.mxu0 %v738
      %796 = vmatprep.subr.mxu0 0.0
      %797 = vmatpush2.msra.mxu0 0.0
      %798 = vmatprep.subr.mxu0 0.0
      %799 = vmatpush2.msra.mxu0 0.0
      %800 = vmatprep.subr.mxu0 0.0
      %801 = vmatpush2.msra.mxu0 0.0
      %802 = vmatprep.subr.mxu0 0.0
      %803 = vmatpush2.msra.mxu0 0.0
      %804 = vmatprep.subr.mxu0 0.0
      %805 = vmatpush2.msra.mxu0 0.0
      %806 = vmatprep.subr.mxu0 0.0
      %807 = vmatpush2.msra.mxu0 0.0
      %808 = vmatprep.subr.mxu0 0.0
      %809 = vmatpush2.msra.mxu0 0.0
      %810 = vmatprep.subr.mxu0 0.0
      %811 = vmatpush2.msra.mxu0 0.0
      %812 = vmatprep.subr.mxu0 0.0
      %813 = vmatpush2.msra.mxu0 0.0
      %814 = vmatprep.subr.mxu0 0.0
      %815 = vmatpush2.msra.mxu0 0.0
      %816 = vmatprep.subr.mxu0 0.0
      %817 = vmatpush2.msra.mxu0 0.0
      %818 = vmatprep.subr.mxu0 0.0
      %819 = vmatpush2.msra.mxu0 0.0
      %820 = vmatprep.subr.mxu0 0.0
      %821 = vmatpush2.msra.mxu0 0.0
      %822 = vmatprep.subr.mxu0 0.0
      %823 = vmatpush2.msra.mxu0 0.0
      %824 = vmatprep.subr.mxu0 0.0
      %825 = vmatpush2.msra.mxu0 0.0
      %826 = vmatprep.subr.mxu0 0.0
      %827 = vmatpush2.msra.mxu0 0.0
      %828 = vmatprep.mubr.f32.mxu0 0.0
      %829 = vmatmul.mubr.f32.gmra.mxu0 %v737
      %v830 = vpop.f32.mrf.mxu0
      %v831 = vadd.f32 %v762, %v830
      %v832 = vpop.f32.mrf.mxu0
      %833 = vdwg.mxu0
      %v834 = vmul.f32 %v831, %v626
      %v835 = vld [vmem:[#allocation2] sm:$0xff]
      %v836 = vadd.f32 %v834, 0.0
      %v837 = vadd.f32 %v835, %v836
      %838 = vst [vmem:[#allocation2] sm:$0xff] %v837
      %p839 = scmp.eq.s32.totalorder %s30, 1
      // Predicated region
      $region93: #{din_forward.1} parent=87 // pred_check
        %p840 = pneg %p839
      $region94: #{din_forward.1} parent=87 // pred_check_branch
        %842 = sbr.rel (%p840) target = $region96
      $region95: #{din_forward.1} parent=87 // pred_region
        %v843 = vld [vmem:[#allocation2] sm:$0xff]
        %845 = vrot.lane.b32.xlu0 %v843, 96
        %v846 = vpop.permute.xlu0 %845
        %v848 = vadd.f32 %v843, %v846
        %849 = vrot.lane.b32.xlu0 %v843, 64
        %v850 = vpop.permute.xlu0 %849
        %v852 = vadd.f32 %v848, %v850
        %853 = vrot.lane.b32.xlu0 %v843, 32
        %v854 = vpop.permute.xlu0 %853
        %v856 = vadd.f32 %v852, %v854
        %v857 = vld [vmem:[%s2] sm:$0xff]
        %v858 = vld [vmem:[%s3] sm:$0xff]
        %860 = vrot.lane.b32.xlu0 %v533, 32
        %v861 = vpop.permute.xlu0 %860
        %864 = vrot.lane.b32.xlu0 %v858, 64
        %v865 = vpop.permute.xlu0 %864
        %868 = vrot.lane.b32.xlu0 %v856, 96
        %v869 = vpop.permute.xlu0 %868
        %vm871 = vcmask 261120
        %v872 = vsel %vm871, %v857, %v861
        %vm873 = vcmask 523264
        %v874 = vsel %vm873, %v872, %v865
        %vm875 = vcmask 785408
        %v876 = vsel %vm875, %v874, %v869
        %v877 = vld [vmem:[%s9] sm:$0xff]
        %v878 = vld [vmem:[%s9 + $0x8] sm:$0xff]
        %v879 = vld [vmem:[%s9 + $0x10] sm:$0xff]
        %v880 = vld [vmem:[%s9 + $0x18] sm:$0xff]
        %v881 = vld [vmem:[%s9 + $0x20] sm:$0xff]
        %v882 = vld [vmem:[%s9 + $0x28] sm:$0xff]
        %v883 = vld [vmem:[%s9 + $0x30] sm:$0xff]
        %v884 = vld [vmem:[%s9 + $0x38] sm:$0xff]
        %v885 = vld [vmem:[%s9 + $0x40] sm:$0xff]
        %v886 = vld [vmem:[%s9 + $0x48] sm:$0xff]
        %v887 = vld [vmem:[%s9 + $0x50] sm:$0xff]
        %v888 = vld [vmem:[%s9 + $0x58] sm:$0xff]
        %v889 = vld [vmem:[%s9 + $0x60] sm:$0xff]
        %v890 = vld [vmem:[%s9 + $0x68] sm:$0xff]
        %v891 = vld [vmem:[%s9 + $0x70] sm:$0xff]
        %v892 = vld [vmem:[%s9 + $0x78] sm:$0xff]
        %v893 = vld [vmem:[%s10] sm:$0x1]
        %v895 = vlaneseq
        %v896 = vshrl.u32 %v895, 7
        %v897 = vsub.s32 0, %v896
        %v898 = vrot.slane %v893, %v897
        %900 = vmatprep.subr.mxu0 0.0
        %901 = vmatpush1.msra.mxu0 %v892
        %902 = vmatprep.subr.mxu0 0.0
        %903 = vmatpush1.msra.mxu0 %v891
        %904 = vmatprep.subr.mxu0 0.0
        %905 = vmatpush1.msra.mxu0 %v890
        %906 = vmatprep.subr.mxu0 0.0
        %907 = vmatpush1.msra.mxu0 %v889
        %908 = vmatprep.subr.mxu0 0.0
        %909 = vmatpush1.msra.mxu0 %v888
        %910 = vmatprep.subr.mxu0 0.0
        %911 = vmatpush1.msra.mxu0 %v887
        %912 = vmatprep.subr.mxu0 0.0
        %913 = vmatpush1.msra.mxu0 %v886
        %914 = vmatprep.subr.mxu0 0.0
        %915 = vmatpush1.msra.mxu0 %v885
        %916 = vmatprep.subr.mxu0 0.0
        %917 = vmatpush1.msra.mxu0 %v884
        %918 = vmatprep.subr.mxu0 0.0
        %919 = vmatpush1.msra.mxu0 %v883
        %920 = vmatprep.subr.mxu0 0.0
        %921 = vmatpush1.msra.mxu0 %v882
        %922 = vmatprep.subr.mxu0 0.0
        %923 = vmatpush1.msra.mxu0 %v881
        %924 = vmatprep.subr.mxu0 0.0
        %925 = vmatpush1.msra.mxu0 %v880
        %926 = vmatprep.subr.mxu0 0.0
        %927 = vmatpush1.msra.mxu0 %v879
        %928 = vmatprep.subr.mxu0 0.0
        %929 = vmatpush1.msra.mxu0 %v878
        %930 = vmatprep.subr.mxu0 0.0
        %931 = vmatpush1.msra.mxu0 %v877
        %932 = vmatprep.subr.mxu0 0.0
        %933 = vmatpush2.msra.mxu0 0.0
        %934 = vmatprep.subr.mxu0 0.0
        %935 = vmatpush2.msra.mxu0 0.0
        %936 = vmatprep.subr.mxu0 0.0
        %937 = vmatpush2.msra.mxu0 0.0
        %938 = vmatprep.subr.mxu0 0.0
        %939 = vmatpush2.msra.mxu0 0.0
        %940 = vmatprep.subr.mxu0 0.0
        %941 = vmatpush2.msra.mxu0 0.0
        %942 = vmatprep.subr.mxu0 0.0
        %943 = vmatpush2.msra.mxu0 0.0
        %944 = vmatprep.subr.mxu0 0.0
        %945 = vmatpush2.msra.mxu0 0.0
        %946 = vmatprep.subr.mxu0 0.0
        %947 = vmatpush2.msra.mxu0 0.0
        %948 = vmatprep.subr.mxu0 0.0
        %949 = vmatpush2.msra.mxu0 0.0
        %950 = vmatprep.subr.mxu0 0.0
        %951 = vmatpush2.msra.mxu0 0.0
        %952 = vmatprep.subr.mxu0 0.0
        %953 = vmatpush2.msra.mxu0 0.0
        %954 = vmatprep.subr.mxu0 0.0
        %955 = vmatpush2.msra.mxu0 0.0
        %956 = vmatprep.subr.mxu0 0.0
        %957 = vmatpush2.msra.mxu0 0.0
        %958 = vmatprep.subr.mxu0 0.0
        %959 = vmatpush2.msra.mxu0 0.0
        %960 = vmatprep.subr.mxu0 0.0
        %961 = vmatpush2.msra.mxu0 0.0
        %962 = vmatprep.subr.mxu0 0.0
        %963 = vmatpush2.msra.mxu0 0.0
        %964 = vmatprep.mubr.f32.mxu0 0.0
        %965 = vmatmul.mubr.f32.gmra.mxu0 %v876
        %v966 = vpop.f32.mrf.mxu0
        %v967 = vadd.f32 %v898, %v966
        %v968 = vpop.f32.mrf.mxu0
        %969 = vdwg.mxu0
        %v970 = vld [vmem:[%s11] sm:$0x1]
        %vm971 = vcmask 654336
        %v972 = vsel %vm971, %v967, 0.0
        %v973 = vrot.slane %v972, 4
        %v974 = vadd.f32 %v972, %v973
        %v975 = vrot.slane %v974, 2
        %v976 = vadd.f32 %v974, %v975
        %v977 = vrot.slane %v976, 1
        %v978 = vadd.f32 %v976, %v977
        %v979 = vrcp.pop 8.0
        %v980 = vmul.f32 %v978, %v979
        %v981 = vsub.f32 %v967, %v980
        %v982 = vmul.f32 %v981, %v981
        %v983 = vsel %vm971, %v982, 0.0
        %v984 = vrot.slane %v983, 4
        %v985 = vadd.f32 %v983, %v984
        %v986 = vrot.slane %v985, 2
        %v987 = vadd.f32 %v985, %v986
        %v988 = vrot.slane %v987, 1
        %v989 = vadd.f32 %v987, %v988
        %v990 = vmul.f32 %v989, %v979
        %v991 = vadd.f32 %v990, 1e-05
        %v992 = vrsqrt.pop %v991
        %v993 = vmul.f32 %v981, %v992
        %v994 = vxor.u32 %v993, 2147483648
        %v995 = vmul.f32 %v994, 1.442695
        %v996 = vpow.pop %v995
        %v997 = vadd.f32 %v996, 1.0
        %v998 = vrcp.pop %v997
        %v999 = vmul.f32 1.0, %v998
        %v1000 = vmul.f32 %v999, %v967
        %v1001 = vsub.f32 1.0, %v999
        %v1003 = vlaneseq
        %v1004 = vshrl.u32 %v1003, 7
        %v1005 = vsub.s32 0, %v1004
        %v1006 = vrot.slane %v970, %v1005
        %v1008 = vmul.f32 %v1001, %v1006
        %v1009 = vmul.f32 %v1008, %v967
        %v1010 = vadd.f32 %v1000, %v1009
        %v1011 = vld [vmem:[%s12] sm:$0xff]
        %v1012 = vld [vmem:[%s12 + $0x8] sm:$0xff]
        %v1013 = vld [vmem:[%s12 + $0x10] sm:$0xff]
        %v1014 = vld [vmem:[%s12 + $0x18] sm:$0xff]
        %v1015 = vld [vmem:[%s12 + $0x20] sm:$0xff]
        %v1016 = vld [vmem:[%s12 + $0x28] sm:$0xff]
        %v1017 = vld [vmem:[%s12 + $0x30] sm:$0xff]
        %v1018 = vld [vmem:[%s12 + $0x38] sm:$0xff]
        %v1019 = vld [vmem:[%s12 + $0x40] sm:$0xff]
        %v1020 = vld [vmem:[%s12 + $0x48] sm:$0xff]
        %v1021 = vld [vmem:[%s13] sm:$0x1]
        %v1023 = vlaneseq
        %v1024 = vshrl.u32 %v1023, 7
        %v1025 = vsub.s32 0, %v1024
        %v1026 = vrot.slane %v1021, %v1025
        %v1029 = vsel %vm971, %v1010, 0
        %1031 = vmatprep.subr.mxu0 0.0
        %1032 = vmatpush1.msra.mxu0 0.0
        %1033 = vmatprep.subr.mxu0 0.0
        %1034 = vmatpush1.msra.mxu0 0.0
        %1035 = vmatprep.subr.mxu0 0.0
        %1036 = vmatpush1.msra.mxu0 0.0
        %1037 = vmatprep.subr.mxu0 0.0
        %1038 = vmatpush1.msra.mxu0 0.0
        %1039 = vmatprep.subr.mxu0 0.0
        %1040 = vmatpush1.msra.mxu0 0.0
        %1041 = vmatprep.subr.mxu0 0.0
        %1042 = vmatpush1.msra.mxu0 0.0
        %1043 = vmatprep.subr.mxu0 0.0
        %1044 = vmatpush1.msra.mxu0 %v1020
        %1045 = vmatprep.subr.mxu0 0.0
        %1046 = vmatpush1.msra.mxu0 %v1019
        %1047 = vmatprep.subr.mxu0 0.0
        %1048 = vmatpush1.msra.mxu0 %v1018
        %1049 = vmatprep.subr.mxu0 0.0
        %1050 = vmatpush1.msra.mxu0 %v1017
        %1051 = vmatprep.subr.mxu0 0.0
        %1052 = vmatpush1.msra.mxu0 %v1016
        %1053 = vmatprep.subr.mxu0 0.0
        %1054 = vmatpush1.msra.mxu0 %v1015
        %1055 = vmatprep.subr.mxu0 0.0
        %1056 = vmatpush1.msra.mxu0 %v1014
        %1057 = vmatprep.subr.mxu0 0.0
        %1058 = vmatpush1.msra.mxu0 %v1013
        %1059 = vmatprep.subr.mxu0 0.0
        %1060 = vmatpush1.msra.mxu0 %v1012
        %1061 = vmatprep.subr.mxu0 0.0
        %1062 = vmatpush1.msra.mxu0 %v1011
        %1063 = vmatprep.subr.mxu0 0.0
        %1064 = vmatpush2.msra.mxu0 0.0
        %1065 = vmatprep.subr.mxu0 0.0
        %1066 = vmatpush2.msra.mxu0 0.0
        %1067 = vmatprep.subr.mxu0 0.0
        %1068 = vmatpush2.msra.mxu0 0.0
        %1069 = vmatprep.subr.mxu0 0.0
        %1070 = vmatpush2.msra.mxu0 0.0
        %1071 = vmatprep.subr.mxu0 0.0
        %1072 = vmatpush2.msra.mxu0 0.0
        %1073 = vmatprep.subr.mxu0 0.0
        %1074 = vmatpush2.msra.mxu0 0.0
        %1075 = vmatprep.subr.mxu0 0.0
        %1076 = vmatpush2.msra.mxu0 0.0
        %1077 = vmatprep.subr.mxu0 0.0
        %1078 = vmatpush2.msra.mxu0 0.0
        %1079 = vmatprep.subr.mxu0 0.0
        %1080 = vmatpush2.msra.mxu0 0.0
        %1081 = vmatprep.subr.mxu0 0.0
        %1082 = vmatpush2.msra.mxu0 0.0
        %1083 = vmatprep.subr.mxu0 0.0
        %1084 = vmatpush2.msra.mxu0 0.0
        %1085 = vmatprep.subr.mxu0 0.0
        %1086 = vmatpush2.msra.mxu0 0.0
        %1087 = vmatprep.subr.mxu0 0.0
        %1088 = vmatpush2.msra.mxu0 0.0
        %1089 = vmatprep.subr.mxu0 0.0
        %1090 = vmatpush2.msra.mxu0 0.0
        %1091 = vmatprep.subr.mxu0 0.0
        %1092 = vmatpush2.msra.mxu0 0.0
        %1093 = vmatprep.subr.mxu0 0.0
        %1094 = vmatpush2.msra.mxu0 0.0
        %1095 = vmatprep.mubr.f32.mxu0 0.0
        %1096 = vmatmul.mubr.f32.gmra.mxu0 %v1029
        %v1097 = vpop.f32.mrf.mxu0
        %v1098 = vadd.f32 %v1026, %v1097
        %v1099 = vpop.f32.mrf.mxu0
        %1100 = vdwg.mxu0
        %v1101 = vld [vmem:[%s14] sm:$0x1]
        %vm1102 = vcmask 326656
        %v1103 = vsel %vm1102, %v1098, 0.0
        %v1104 = vrot.slane %v1103, 4
        %v1105 = vadd.f32 %v1103, %v1104
        %v1106 = vrot.slane %v1105, 2
        %v1107 = vadd.f32 %v1105, %v1106
        %v1108 = vrot.slane %v1107, 1
        %v1109 = vadd.f32 %v1107, %v1108
        %v1110 = vmul.f32 %v1109, %v979
        %v1111 = vsub.f32 %v1098, %v1110
        %v1112 = vmul.f32 %v1111, %v1111
        %v1113 = vsel %vm1102, %v1112, 0.0
        %v1114 = vrot.slane %v1113, 4
        %v1115 = vadd.f32 %v1113, %v1114
        %v1116 = vrot.slane %v1115, 2
        %v1117 = vadd.f32 %v1115, %v1116
        %v1118 = vrot.slane %v1117, 1
        %v1119 = vadd.f32 %v1117, %v1118
        %v1120 = vmul.f32 %v1119, %v979
        %v1121 = vadd.f32 %v1120, 1e-05
        %v1122 = vrsqrt.pop %v1121
        %v1123 = vmul.f32 %v1111, %v1122
        %v1124 = vxor.u32 %v1123, 2147483648
        %v1125 = vmul.f32 %v1124, 1.442695
        %v1126 = vpow.pop %v1125
        %v1127 = vadd.f32 %v1126, 1.0
        %v1128 = vrcp.pop %v1127
        %v1129 = vmul.f32 1.0, %v1128
        %v1130 = vmul.f32 %v1129, %v1098
        %v1131 = vsub.f32 1.0, %v1129
        %v1133 = vlaneseq
        %v1134 = vshrl.u32 %v1133, 7
        %v1135 = vsub.s32 0, %v1134
        %v1136 = vrot.slane %v1101, %v1135
        %v1138 = vmul.f32 %v1131, %v1136
        %v1139 = vmul.f32 %v1138, %v1098
        %v1140 = vadd.f32 %v1130, %v1139
        %v1141 = vld [vmem:[%s15] sm:$0xff]
        %v1142 = vld [vmem:[%s15 + $0x8] sm:$0xff]
        %v1143 = vld [vmem:[%s15 + $0x10] sm:$0xff]
        %v1144 = vld [vmem:[%s15 + $0x18] sm:$0xff]
        %v1145 = vld [vmem:[%s15 + $0x20] sm:$0xff]
        %v1146 = vld [vmem:[%s16] sm:$0x1]
        %v1148 = vlaneseq
        %v1149 = vshrl.u32 %v1148, 7
        %v1150 = vsub.s32 0, %v1149
        %v1151 = vrot.slane %v1146, %v1150
        %v1154 = vsel %vm1102, %v1140, 0
        %1156 = vmatprep.subr.mxu0 0.0
        %1157 = vmatpush1.msra.mxu0 0.0
        %1158 = vmatprep.subr.mxu0 0.0
        %1159 = vmatpush1.msra.mxu0 0.0
        %1160 = vmatprep.subr.mxu0 0.0
        %1161 = vmatpush1.msra.mxu0 0.0
        %1162 = vmatprep.subr.mxu0 0.0
        %1163 = vmatpush1.msra.mxu0 0.0
        %1164 = vmatprep.subr.mxu0 0.0
        %1165 = vmatpush1.msra.mxu0 0.0
        %1166 = vmatprep.subr.mxu0 0.0
        %1167 = vmatpush1.msra.mxu0 0.0
        %1168 = vmatprep.subr.mxu0 0.0
        %1169 = vmatpush1.msra.mxu0 0.0
        %1170 = vmatprep.subr.mxu0 0.0
        %1171 = vmatpush1.msra.mxu0 0.0
        %1172 = vmatprep.subr.mxu0 0.0
        %1173 = vmatpush1.msra.mxu0 0.0
        %1174 = vmatprep.subr.mxu0 0.0
        %1175 = vmatpush1.msra.mxu0 0.0
        %1176 = vmatprep.subr.mxu0 0.0
        %1177 = vmatpush1.msra.mxu0 0.0
        %1178 = vmatprep.subr.mxu0 0.0
        %1179 = vmatpush1.msra.mxu0 %v1145
        %1180 = vmatprep.subr.mxu0 0.0
        %1181 = vmatpush1.msra.mxu0 %v1144
        %1182 = vmatprep.subr.mxu0 0.0
        %1183 = vmatpush1.msra.mxu0 %v1143
        %1184 = vmatprep.subr.mxu0 0.0
        %1185 = vmatpush1.msra.mxu0 %v1142
        %1186 = vmatprep.subr.mxu0 0.0
        %1187 = vmatpush1.msra.mxu0 %v1141
        %1188 = vmatprep.subr.mxu0 0.0
        %1189 = vmatpush2.msra.mxu0 0.0
        %1190 = vmatprep.subr.mxu0 0.0
        %1191 = vmatpush2.msra.mxu0 0.0
        %1192 = vmatprep.subr.mxu0 0.0
        %1193 = vmatpush2.msra.mxu0 0.0
        %1194 = vmatprep.subr.mxu0 0.0
        %1195 = vmatpush2.msra.mxu0 0.0
        %1196 = vmatprep.subr.mxu0 0.0
        %1197 = vmatpush2.msra.mxu0 0.0
        %1198 = vmatprep.subr.mxu0 0.0
        %1199 = vmatpush2.msra.mxu0 0.0
        %1200 = vmatprep.subr.mxu0 0.0
        %1201 = vmatpush2.msra.mxu0 0.0
        %1202 = vmatprep.subr.mxu0 0.0
        %1203 = vmatpush2.msra.mxu0 0.0
        %1204 = vmatprep.subr.mxu0 0.0
        %1205 = vmatpush2.msra.mxu0 0.0
        %1206 = vmatprep.subr.mxu0 0.0
        %1207 = vmatpush2.msra.mxu0 0.0
        %1208 = vmatprep.subr.mxu0 0.0
        %1209 = vmatpush2.msra.mxu0 0.0
        %1210 = vmatprep.subr.mxu0 0.0
        %1211 = vmatpush2.msra.mxu0 0.0
        %1212 = vmatprep.subr.mxu0 0.0
        %1213 = vmatpush2.msra.mxu0 0.0
        %1214 = vmatprep.subr.mxu0 0.0
        %1215 = vmatpush2.msra.mxu0 0.0
        %1216 = vmatprep.subr.mxu0 0.0
        %1217 = vmatpush2.msra.mxu0 0.0
        %1218 = vmatprep.subr.mxu0 0.0
        %1219 = vmatpush2.msra.mxu0 0.0
        %1220 = vmatprep.mubr.f32.mxu0 0.0
        %1221 = vmatmul.mubr.f32.gmra.mxu0 %v1154
        %v1222 = vpop.f32.mrf.mxu0
        %v1223 = vadd.f32 %v1151, %v1222
        %v1224 = vpop.f32.mrf.mxu0
        %1225 = vdwg.mxu0
        %1226 = vst [vmem:[%s17] sm:$0xff] %v1223
      $region96: #{din_forward.1} parent=87 // pred_fallthru
        _
      // Predicated region
      $region97: #{din_forward.1} parent=87 // pred_check
        %p1227 = pneg %p405
      $region98: #{din_forward.1} parent=87 // pred_check_branch
        %1229 = sbr.rel (%p1227) target = $region100
      $region99: #{din_forward.1} parent=87 // pred_region
        _
      $region100: #{din_forward.1} parent=87 // pred_fallthru
        _
      // Predicated region
      $region101: #{din_forward.1} parent=87 // pred_check
        %p1230 = pneg %p405
      $region102: #{din_forward.1} parent=87 // pred_check_branch
        %1232 = sbr.rel (%p1230) target = $region104
      $region103: #{din_forward.1} parent=87 // pred_region
        _
      $region104: #{din_forward.1} parent=87 // pred_fallthru
        _
    $region88: #{din_forward.1} parent=5 // pred_fallthru
      _
    %p1233 = scmp.le.s32.totalorder 2, %s25
    // Predicated region
    $region105: #{din_forward.1} parent=5 // pred_check
      %p1234 = pneg %p1233
    $region106: #{din_forward.1} parent=5 // pred_check_branch
      %1236 = sbr.rel (%p1234) target = $region108
    $region107: #{din_forward.1} parent=5 // pred_region
      %s1237 = ssub.s32 %s25, 2
    $region108: #{din_forward.1} parent=5 // pred_fallthru
      _
  $region6: #{din_forward.1} parent=0 // loop_footer
    %s29 = sadd.s32 1, %s25
  $region7: #{din_forward.1} parent=0 // loop_footer_branch
    %24 = sbr.rel target = $region3
  $region8: #{din_forward.1} parent=0 // loop_exit
    _

</llo_original>
